<compile_context>
chip_gen: v5e
topology: v5e:2x2
jax: 0.10.0
libtpu: 0.0.40
codegen_flags: <defaults>
</compile_context>

<pallas_src>
import functools

import jax
import jax.numpy as jnp
from jax.experimental import pallas as pl
from jax.experimental.pallas import tpu as pltpu


# ----------------------------- Pallas kernel ------------------------------- #
def tamkot_chunk_kernel(
    x_ref,       # (tc, B, Kin)  pre-scaled [cQ*qa, cL*l, cQ, cL] per step
    c_ref,       # (tc, B, 4)    hidden-transition coeffs [cQQ, cLL, cQL, cLQ]
    qdot_ref,    # (1, B, tc)    q_{t+1} @ Wqh_q + bqh, precomputed per step
    Win_ref,     # (Kin, 4H)     stacked input/bias weights (gates on N axis)
    Whid_ref,    # (4H, 4H)      stacked hidden-transition weights
    wqh_ref,     # (1, H)        prediction weight row for h
    out_ref,     # (1, B, tc)
    h_scr,       # VMEM (B, H)   recurrent hidden state (persists across grid)
    m_scr,       # VMEM (B, H)   recurrent memory cell
    *, tc, hidden,
):
    @pl.when(pl.program_id(0) == 0)
    def _():
        h_scr[...] = jnp.zeros_like(h_scr)
        m_scr[...] = jnp.zeros_like(m_scr)

    H = hidden
    Win = Win_ref[...]
    Whid = Whid_ref[...]
    wqh = wqh_ref[...]                       # (1, H) f32
    cdt = Whid.dtype

    h = h_scr[...]                           # (B, H) f32
    m = m_scr[...]                           # (B, H) f32

    hdots = []
    for j in range(tc):                      # static unroll over the chunk
        x = x_ref[j]                         # (B, Kin)
        c = c_ref[j]                         # (B, 4)
        h_scaled = jnp.concatenate(
            [c[:, 0:1] * h, c[:, 1:2] * h, c[:, 2:3] * h, c[:, 3:4] * h],
            axis=-1).astype(cdt)             # (B, 4H)
        pre = (jnp.dot(x, Win, preferred_element_type=jnp.float32)
               + jnp.dot(h_scaled, Whid, preferred_element_type=jnp.float32))
        i_g = jax.nn.sigmoid(pre[:, 0:H])
        g_g = jnp.tanh(pre[:, H:2 * H])
        f_g = jax.nn.sigmoid(pre[:, 2 * H:3 * H])
        o_g = jax.nn.sigmoid(pre[:, 3 * H:4 * H])
        m = f_g * m + i_g * g_g
        h = o_g * jnp.tanh(m)
        # prediction h-side dot as a lane reduce (XLU), q-side precomputed
        hdots.append(jnp.sum(h * wqh, axis=-1, keepdims=True))   # (B, 1)

    h_scr[...] = h
    m_scr[...] = m
    out_ref[0] = jax.nn.sigmoid(jnp.concatenate(hdots, axis=-1) + qdot_ref[0])


# ------------------------------- wrapper ----------------------------------- #
def tamkot_forward(q_data, a_data, l_data, d_data, params, *, tc=8,
                   matmul_dtype=jnp.float32):
    """q/a/l/d_data: int32 (B, S). Returns (B, S-2) float32 predictions.

    matmul_dtype=jnp.bfloat16 halves weight/activation DMA + MXU passes while
    keeping gating/sigmoid/tanh in f32 (safe on v5e too).
    """
    B, S = q_data.shape
    T = S - 2
    Eq = params["q_table"].shape[1]
    Ea = params["a_table"].shape[1]
    El = params["l_table"].shape[1]
    H = params["Wh"].shape[-1]

    nb = (T + tc - 1) // tc
    T_pad = nb * tc
    B_pad = ((B + 7) // 8) * 8               # pad batch to full sublanes

    # ---- glue: sequence-major embedding gathers (no (B,S,E) transposes) ----
    q_embed = jnp.take(params["q_table"], q_data.T, axis=0)   # (S, B, Eq)
    a_embed = jnp.take(params["a_table"], a_data.T, axis=0)   # (S, B, Ea)
    l_embed = jnp.take(params["l_table"], l_data.T, axis=0)   # (S, B, El)
    d = d_data.T.astype(jnp.float32)                          # (S, B)

    qa = jnp.concatenate([q_embed, a_embed], axis=-1)         # (S, B, Eq+Ea)

    # shifted slices for steps t = 1 .. S-2
    qa_t = qa[1:S - 1]                                        # (T, B, Eq+Ea)
    l_t = l_embed[1:S - 1]                                    # (T, B, El)
    dt = d[1:S - 1][..., None]                                # (T, B, 1)
    dtm1 = d[0:S - 2][..., None]                              # (T, B, 1)

    cQ, cL = 1.0 - dt, dt
    # hidden-transition coefficients [QQ, LL, QL, LQ] (exact 0/1 products)
    c_hid = jnp.concatenate(
        [cQ * (1.0 - dtm1), cL * dtm1, (1.0 - dtm1) * cL, dtm1 * cQ], axis=-1)

    # pre-scaled inputs + bias-selector columns → single input matmul per step
    x_aug = jnp.concatenate([cQ * qa_t, cL * l_t, cQ, cL], axis=-1)
    Kin = Eq + Ea + El + 2

    # ---- stacked weights (gates on the N axis) ----
    WQ_s = jnp.transpose(params["WQ"], (1, 0, 2)).reshape(Eq + Ea, 4 * H)
    WL_s = jnp.transpose(params["WL"], (1, 0, 2)).reshape(El, 4 * H)
    bQ_s = params["bQ"].reshape(1, 4 * H)
    bL_s = params["bL"].reshape(1, 4 * H)
    W_in = jnp.concatenate([WQ_s, WL_s, bQ_s, bL_s], axis=0)      # (Kin, 4H)
    # Wh (gate, trans, H, H) → rows = trans*H + h_in, cols = gate*H + h_out
    W_hid = jnp.transpose(params["Wh"], (1, 2, 0, 3)).reshape(4 * H, 4 * H)

    # prediction head: split Wqh; precompute the q_{t+1}-side dot (+ bias)
    wqh_h = params["Wqh"][:H].reshape(1, H)                       # (1, H)
    wqh_q = params["Wqh"][H:, 0]                                  # (Eq,)
    q_next = q_embed[2:S]                                         # (T, B, Eq)
    qdot = jnp.einsum("tbe,e->tb", q_next, wqh_q) + params["bqh"][0, 0]

    # ---- pad time to multiple of tc, batch to multiple of 8 ----
    x_aug = jnp.pad(x_aug, ((0, T_pad - T), (0, B_pad - B), (0, 0)))
    c_hid = jnp.pad(c_hid, ((0, T_pad - T), (0, B_pad - B), (0, 0)))
    qdot = jnp.pad(qdot, ((0, T_pad - T), (0, B_pad - B)))
    qdot = qdot.reshape(nb, tc, B_pad).transpose(0, 2, 1)         # (nb,B_pad,tc)

    x_aug = x_aug.astype(matmul_dtype)
    W_in = W_in.astype(matmul_dtype)
    W_hid = W_hid.astype(matmul_dtype)

    grid_spec = pltpu.PrefetchScalarGridSpec(
        num_scalar_prefetch=0,
        grid=(nb,),
        in_specs=[
            pl.BlockSpec((tc, B_pad, Kin), lambda tb: (tb, 0, 0)),
            pl.BlockSpec((tc, B_pad, 4), lambda tb: (tb, 0, 0)),
            pl.BlockSpec((1, B_pad, tc), lambda tb: (tb, 0, 0)),
            pl.BlockSpec((Kin, 4 * H), lambda tb: (0, 0)),        # loop-invariant
            pl.BlockSpec((4 * H, 4 * H), lambda tb: (0, 0)),      # loop-invariant
            pl.BlockSpec((1, H), lambda tb: (0, 0)),              # loop-invariant
        ],
        out_specs=pl.BlockSpec((1, B_pad, tc), lambda tb: (tb, 0, 0)),
        scratch_shapes=[
            pltpu.VMEM((B_pad, H), jnp.float32),   # h
            pltpu.VMEM((B_pad, H), jnp.float32),   # m
        ],
    )

    out = pl.pallas_call(
        functools.partial(tamkot_chunk_kernel, tc=tc, hidden=H),
        out_shape=jax.ShapeDtypeStruct((nb, B_pad, tc), jnp.float32),
        grid_spec=grid_spec,
        compiler_params=pltpu.CompilerParams(
            dimension_semantics=("arbitrary",),      # recurrence over time
            vmem_limit_bytes=64 * 1024 * 1024,       # fits v7x's 64 MiB too
        ),
    )(x_aug, c_hid, qdot, W_in, W_hid, wqh_h)

    preds = out.transpose(1, 0, 2).reshape(B_pad, T_pad)          # (B_pad,T_pad)
    return preds[:B, :T]


# -------------------------- pure-JAX reference ----------------------------- #
def tamkot_reference(q_data, a_data, l_data, d_data, params):
    B, S = q_data.shape
    H = params["Wh"].shape[-1]
    q_embed = jnp.take(params["q_table"], q_data, axis=0)
    a_embed = jnp.take(params["a_table"], a_data, axis=0)
    l_embed = jnp.take(params["l_table"], l_data, axis=0)
    qa_all = jnp.concatenate([q_embed, a_embed], axis=-1)
    d = d_data.astype(jnp.float32)
    Wqh_h, Wqh_q = params["Wqh"][:H], params["Wqh"][H:]

    h = jnp.zeros((B, H), jnp.float32)
    m = jnp.zeros((B, H), jnp.float32)
    preds = []
    for t in range(1, S - 1):
        qa = qa_all[:, t]
        l = l_embed[:, t]
        dt = d[:, t:t + 1]
        dt1 = d[:, t - 1:t]
        pres = []
        for g in range(4):
            pre = ((1 - dt) * (qa @ params["WQ"][g] + params["bQ"][g, 0])
                   + dt * (l @ params["WL"][g] + params["bL"][g, 0])
                   + (1 - dt) * (1 - dt1) * (h @ params["Wh"][g, 0])
                   + dt * dt1 * (h @ params["Wh"][g, 1])
                   + (1 - dt1) * dt * (h @ params["Wh"][g, 2])
                   + dt1 * (1 - dt) * (h @ params["Wh"][g, 3]))
            pres.append(pre)
        i_g = jax.nn.sigmoid(pres[0])
        g_g = jnp.tanh(pres[1])
        f_g = jax.nn.sigmoid(pres[2])
        o_g = jax.nn.sigmoid(pres[3])
        m = f_g * m + i_g * g_g
        h = o_g * jnp.tanh(m)
        qn = q_embed[:, t + 1]
        pred = jax.nn.sigmoid(h @ Wqh_h + qn @ Wqh_q + params["bqh"][0, 0])
        preds.append(pred)
    return jnp.concatenate(preds, axis=-1)


# --------------------------- deterministic init ----------------------------- #
def init_params(key, num_q, num_l, Eq, Ea, El, H, init_std=0.1):
    ks = jax.random.split(key, 10)
    q_table = init_std * jax.random.normal(ks[0], (num_q + 1, Eq), jnp.float32)
    q_table = q_table.at[0].set(0.0)                 # padding_idx=0
    a_table = init_std * jax.random.normal(ks[1], (3, Ea), jnp.float32)
    a_table = a_table.at[2].set(0.0)                 # padding_idx=2
    l_table = init_std * jax.random.normal(ks[2], (num_l + 1, El), jnp.float32)
    l_table = l_table.at[0].set(0.0)                 # padding_idx=0
    # 4 gates: [i, g, f, o]
    WQ = init_std * jax.random.normal(ks[3], (4, Eq + Ea, H), jnp.float32)
    bQ = init_std * jax.random.normal(ks[4], (4, 1, H), jnp.float32)
    WL = init_std * jax.random.normal(ks[5], (4, El, H), jnp.float32)
    bL = init_std * jax.random.normal(ks[6], (4, 1, H), jnp.float32)
    # 4 hidden transitions per gate: [QQ, LL, QL, LQ]
    Wh = init_std * jax.random.normal(ks[7], (4, 4, H, H), jnp.float32)
    Wqh = init_std * jax.random.normal(ks[8], (H + Eq, 1), jnp.float32)
    bqh = init_std * jax.random.normal(ks[9], (1, 1), jnp.float32)
    # TODO(synk): q_bias embedding and the W_Lh head exist in __init__ but are
    # unused by the returned forward output, so they are omitted here.
    return dict(q_table=q_table, a_table=a_table, l_table=l_table,
                WQ=WQ, bQ=bQ, WL=WL, bL=bL, Wh=Wh, Wqh=Wqh, bqh=bqh)


if __name__ == "__main__":
    key = jax.random.PRNGKey(0)
    B, S = 4, 8
    Eq, Ea, El, H = 16, 16, 16, 32          # 4H = 128 → lane-full gate block
    num_q, num_l = 20, 12

    k0, k1, k2, k3, k4 = jax.random.split(key, 5)
    params = init_params(k0, num_q, num_l, Eq, Ea, El, H)

    q_data = jax.random.randint(k1, (B, S), 1, num_q + 1, jnp.int32)
    a_data = jax.random.randint(k2, (B, S), 0, 2, jnp.int32)
    l_data = jax.random.randint(k3, (B, S), 1, num_l + 1, jnp.int32)
    d_data = jax.random.randint(k4, (B, S), 0, 2, jnp.int32)

    out = jax.block_until_ready(
        tamkot_forward(q_data, a_data, l_data, d_data, params))
    ref = jax.block_until_ready(
        tamkot_reference(q_data, a_data, l_data, d_data, params))

    assert out.shape == (B, S - 2), out.shape
    # d ∈ {0,1} → pre-scaling is exact; only f32 accumulation-order differences
    assert jnp.allclose(out, ref, atol=2e-5, rtol=2e-5), (
        f"max abs err {jnp.max(jnp.abs(out - ref))}")
    print("KERNEL_OK")
</pallas_src>

<mosaic_0001>
module attributes {stable_mosaic.version = 11 : i64} {
  func.func @tamkot_chunk_kernel(%arg0: i32, %arg1: memref<8x8x50xf32, #tpu.memory_space<vmem>>, %arg2: memref<8x8x4xf32, #tpu.memory_space<vmem>>, %arg3: memref<1x8x8xf32, #tpu.memory_space<vmem>>, %arg4: memref<50x128xf32, #tpu.memory_space<vmem>>, %arg5: memref<128x128xf32, #tpu.memory_space<vmem>>, %arg6: memref<1x32xf32, #tpu.memory_space<vmem>>, %arg7: memref<1x8x8xf32, #tpu.memory_space<vmem>>, %arg8: memref<8x32xf32, #tpu.memory_space<vmem>>, %arg9: memref<8x32xf32, #tpu.memory_space<vmem>>) attributes {dimension_semantics = [#tpu.dimension_semantics<arbitrary>], iteration_bounds = array<i64: 1>, scalar_prefetch = 0 : i64, scratch_operands = 2 : i64, tpu.core_type = #tpu.core_type<tc>, window_params = [{transform_indices = @transform_0, window_bounds = array<i64: 8, 8, 50>}, {transform_indices = @transform_1, window_bounds = array<i64: 8, 8, 4>}, {transform_indices = @transform_2, window_bounds = array<i64: 1, 8, 8>}, {pipeline_mode = #tpu.pipeline_mode<synchronous>, transform_indices = @transform_3, window_bounds = array<i64: 50, 128>}, {pipeline_mode = #tpu.pipeline_mode<synchronous>, transform_indices = @transform_4, window_bounds = array<i64: 128, 128>}, {pipeline_mode = #tpu.pipeline_mode<synchronous>, transform_indices = @transform_5, window_bounds = array<i64: 1, 32>}, {transform_indices = @transform_6, window_bounds = array<i64: 1, 8, 8>}]} {
    %c0_i32 = arith.constant 0 : i32
    %0 = arith.cmpi eq, %arg0, %c0_i32 : i32
    %1 = arith.extui %0 : i1 to i32
    %c0_i32_0 = arith.constant 0 : i32
    %2 = arith.cmpi ne, %1, %c0_i32_0 : i32
    scf.if %2 {
      %cst_109 = arith.constant 0.000000e+00 : f32
      %414 = vector.broadcast %cst_109 : f32 to vector<8x32xf32>
      %c0_110 = arith.constant 0 : index
      %c0_111 = arith.constant 0 : index
      %415 = vector.load %arg8[%c0_110, %c0_111] : memref<8x32xf32, #tpu.memory_space<vmem>>, vector<8x32xf32>
      tpu.vector_store %arg8[%c0_110, %c0_111], %414 {strides = array<i32>} : memref<8x32xf32, #tpu.memory_space<vmem>>, vector<8x32xf32>,
      %cst_112 = arith.constant 0.000000e+00 : f32
      %416 = vector.broadcast %cst_112 : f32 to vector<8x32xf32>
      %c0_113 = arith.constant 0 : index
      %c0_114 = arith.constant 0 : index
      %417 = vector.load %arg9[%c0_113, %c0_114] : memref<8x32xf32, #tpu.memory_space<vmem>>, vector<8x32xf32>
      tpu.vector_store %arg9[%c0_113, %c0_114], %416 {strides = array<i32>} : memref<8x32xf32, #tpu.memory_space<vmem>>, vector<8x32xf32>,
    } else {
    }
    %c0 = arith.constant 0 : index
    %c0_1 = arith.constant 0 : index
    %3 = vector.load %arg4[%c0, %c0_1] : memref<50x128xf32, #tpu.memory_space<vmem>>, vector<50x128xf32>
    %c0_2 = arith.constant 0 : index
    %c0_3 = arith.constant 0 : index
    %4 = vector.load %arg5[%c0_2, %c0_3] : memref<128x128xf32, #tpu.memory_space<vmem>>, vector<128x128xf32>
    %c0_4 = arith.constant 0 : index
    %c0_5 = arith.constant 0 : index
    %5 = vector.load %arg6[%c0_4, %c0_5] : memref<1x32xf32, #tpu.memory_space<vmem>>, vector<1x32xf32>
    %c0_6 = arith.constant 0 : index
    %c0_7 = arith.constant 0 : index
    %6 = vector.load %arg8[%c0_6, %c0_7] : memref<8x32xf32, #tpu.memory_space<vmem>>, vector<8x32xf32>
    %c0_8 = arith.constant 0 : index
    %c0_9 = arith.constant 0 : index
    %7 = vector.load %arg9[%c0_8, %c0_9] : memref<8x32xf32, #tpu.memory_space<vmem>>, vector<8x32xf32>
    %c0_10 = arith.constant 0 : index
    %c0_11 = arith.constant 0 : index
    %c0_12 = arith.constant 0 : index
    %8 = vector.load %arg1[%c0_10, %c0_11, %c0_12] : memref<8x8x50xf32, #tpu.memory_space<vmem>>, vector<1x8x50xf32>
    %9 = vector.shape_cast %8 : vector<1x8x50xf32> to vector<8x50xf32>
    %c0_13 = arith.constant 0 : index
    %c0_14 = arith.constant 0 : index
    %c0_15 = arith.constant 0 : index
    %10 = vector.load %arg2[%c0_13, %c0_14, %c0_15] : memref<8x8x4xf32, #tpu.memory_space<vmem>>, vector<1x8x4xf32>
    %11 = vector.shape_cast %10 : vector<1x8x4xf32> to vector<8x4xf32>
    %12 = vector.extract_strided_slice %11 {offsets = [0, 0], sizes = [8, 1], strides = [1, 1]} : vector<8x4xf32> to vector<8x1xf32>
    %13 = vector.broadcast %12 : vector<8x1xf32> to vector<8x32xf32>
    %14 = arith.mulf %13, %6 : vector<8x32xf32>
    %15 = vector.extract_strided_slice %11 {offsets = [0, 1], sizes = [8, 1], strides = [1, 1]} : vector<8x4xf32> to vector<8x1xf32>
    %16 = vector.broadcast %15 : vector<8x1xf32> to vector<8x32xf32>
    %17 = arith.mulf %16, %6 : vector<8x32xf32>
    %18 = vector.extract_strided_slice %11 {offsets = [0, 2], sizes = [8, 1], strides = [1, 1]} : vector<8x4xf32> to vector<8x1xf32>
    %19 = vector.broadcast %18 : vector<8x1xf32> to vector<8x32xf32>
    %20 = arith.mulf %19, %6 : vector<8x32xf32>
    %21 = vector.extract_strided_slice %11 {offsets = [0, 3], sizes = [8, 1], strides = [1, 1]} : vector<8x4xf32> to vector<8x1xf32>
    %22 = vector.broadcast %21 : vector<8x1xf32> to vector<8x32xf32>
    %23 = arith.mulf %22, %6 : vector<8x32xf32>
    %24 = tpu.concatenate %14, %17, %20, %23 in 1 : vector<8x32xf32>, vector<8x32xf32>, vector<8x32xf32>, vector<8x32xf32> -> vector<8x128xf32>
    %cst = arith.constant dense<0.000000e+00> : vector<8x128xf32>
    %25 = tpu.matmul %9, %3, %cst {dimension_numbers = #tpu.dot_dimension_numbers<[1], [0], [0], [1], [0, 0, 1, 1], [], []>} : vector<8x50xf32>, vector<50x128xf32>, vector<8x128xf32> -> vector<8x128xf32>
    %cst_16 = arith.constant dense<0.000000e+00> : vector<8x128xf32>
    %26 = tpu.matmul %24, %4, %cst_16 {dimension_numbers = #tpu.dot_dimension_numbers<[1], [0], [0], [1], [0, 0, 1, 1], [], []>} : vector<8x128xf32>, vector<128x128xf32>, vector<8x128xf32> -> vector<8x128xf32>
    %27 = arith.addf %25, %26 : vector<8x128xf32>
    %28 = vector.extract_strided_slice %27 {offsets = [0, 0], sizes = [8, 32], strides = [1, 1]} : vector<8x128xf32> to vector<8x32xf32>
    %29 = arith.negf %28 : vector<8x32xf32>
    %30 = math.exp %29 : vector<8x32xf32>
    %cst_17 = arith.constant 1.000000e+00 : f32
    %31 = vector.broadcast %cst_17 : f32 to vector<8x32xf32>
    %32 = arith.addf %31, %30 : vector<8x32xf32>
    %33 = arith.divf %31, %32 : vector<8x32xf32>
    %34 = vector.extract_strided_slice %27 {offsets = [0, 32], sizes = [8, 32], strides = [1, 1]} : vector<8x128xf32> to vector<8x32xf32>
    %35 = math.tanh %34 : vector<8x32xf32>
    %36 = vector.extract_strided_slice %27 {offsets = [0, 64], sizes = [8, 32], strides = [1, 1]} : vector<8x128xf32> to vector<8x32xf32>
    %37 = arith.negf %36 : vector<8x32xf32>
    %38 = math.exp %37 : vector<8x32xf32>
    %cst_18 = arith.constant 1.000000e+00 : f32
    %39 = vector.broadcast %cst_18 : f32 to vector<8x32xf32>
    %40 = arith.addf %39, %38 : vector<8x32xf32>
    %41 = arith.divf %39, %40 : vector<8x32xf32>
    %42 = vector.extract_strided_slice %27 {offsets = [0, 96], sizes = [8, 32], strides = [1, 1]} : vector<8x128xf32> to vector<8x32xf32>
    %43 = arith.negf %42 : vector<8x32xf32>
    %44 = math.exp %43 : vector<8x32xf32>
    %cst_19 = arith.constant 1.000000e+00 : f32
    %45 = vector.broadcast %cst_19 : f32 to vector<8x32xf32>
    %46 = arith.addf %45, %44 : vector<8x32xf32>
    %47 = arith.divf %45, %46 : vector<8x32xf32>
    %48 = arith.mulf %41, %7 : vector<8x32xf32>
    %49 = arith.mulf %33, %35 : vector<8x32xf32>
    %50 = arith.addf %48, %49 : vector<8x32xf32>
    %51 = math.tanh %50 : vector<8x32xf32>
    %52 = arith.mulf %47, %51 : vector<8x32xf32>
    %53 = vector.broadcast %5 : vector<1x32xf32> to vector<8x32xf32>
    %54 = arith.mulf %52, %53 : vector<8x32xf32>
    %cst_20 = arith.constant dense<0.000000e+00> : vector<8xf32>
    %55 = vector.multi_reduction <add>, %54, %cst_20 [1] : vector<8x32xf32> to vector<8xf32>
    %56 = vector.shape_cast %55 : vector<8xf32> to vector<8x1xf32>
    %c1 = arith.constant 1 : index
    %c0_21 = arith.constant 0 : index
    %c0_22 = arith.constant 0 : index
    %57 = vector.load %arg1[%c1, %c0_21, %c0_22] : memref<8x8x50xf32, #tpu.memory_space<vmem>>, vector<1x8x50xf32>
    %58 = vector.shape_cast %57 : vector<1x8x50xf32> to vector<8x50xf32>
    %c1_23 = arith.constant 1 : index
    %c0_24 = arith.constant 0 : index
    %c0_25 = arith.constant 0 : index
    %59 = vector.load %arg2[%c1_23, %c0_24, %c0_25] : memref<8x8x4xf32, #tpu.memory_space<vmem>>, vector<1x8x4xf32>
    %60 = vector.shape_cast %59 : vector<1x8x4xf32> to vector<8x4xf32>
    %61 = vector.extract_strided_slice %60 {offsets = [0, 0], sizes = [8, 1], strides = [1, 1]} : vector<8x4xf32> to vector<8x1xf32>
    %62 = vector.broadcast %61 : vector<8x1xf32> to vector<8x32xf32>
    %63 = arith.mulf %62, %52 : vector<8x32xf32>
    %64 = vector.extract_strided_slice %60 {offsets = [0, 1], sizes = [8, 1], strides = [1, 1]} : vector<8x4xf32> to vector<8x1xf32>
    %65 = vector.broadcast %64 : vector<8x1xf32> to vector<8x32xf32>
    %66 = arith.mulf %65, %52 : vector<8x32xf32>
    %67 = vector.extract_strided_slice %60 {offsets = [0, 2], sizes = [8, 1], strides = [1, 1]} : vector<8x4xf32> to vector<8x1xf32>
    %68 = vector.broadcast %67 : vector<8x1xf32> to vector<8x32xf32>
    %69 = arith.mulf %68, %52 : vector<8x32xf32>
    %70 = vector.extract_strided_slice %60 {offsets = [0, 3], sizes = [8, 1], strides = [1, 1]} : vector<8x4xf32> to vector<8x1xf32>
    %71 = vector.broadcast %70 : vector<8x1xf32> to vector<8x32xf32>
    %72 = arith.mulf %71, %52 : vector<8x32xf32>
    %73 = tpu.concatenate %63, %66, %69, %72 in 1 : vector<8x32xf32>, vector<8x32xf32>, vector<8x32xf32>, vector<8x32xf32> -> vector<8x128xf32>
    %cst_26 = arith.constant dense<0.000000e+00> : vector<8x128xf32>
    %74 = tpu.matmul %58, %3, %cst_26 {dimension_numbers = #tpu.dot_dimension_numbers<[1], [0], [0], [1], [0, 0, 1, 1], [], []>} : vector<8x50xf32>, vector<50x128xf32>, vector<8x128xf32> -> vector<8x128xf32>
    %cst_27 = arith.constant dense<0.000000e+00> : vector<8x128xf32>
    %75 = tpu.matmul %73, %4, %cst_27 {dimension_numbers = #tpu.dot_dimension_numbers<[1], [0], [0], [1], [0, 0, 1, 1], [], []>} : vector<8x128xf32>, vector<128x128xf32>, vector<8x128xf32> -> vector<8x128xf32>
    %76 = arith.addf %74, %75 : vector<8x128xf32>
    %77 = vector.extract_strided_slice %76 {offsets = [0, 0], sizes = [8, 32], strides = [1, 1]} : vector<8x128xf32> to vector<8x32xf32>
    %78 = arith.negf %77 : vector<8x32xf32>
    %79 = math.exp %78 : vector<8x32xf32>
    %cst_28 = arith.constant 1.000000e+00 : f32
    %80 = vector.broadcast %cst_28 : f32 to vector<8x32xf32>
    %81 = arith.addf %80, %79 : vector<8x32xf32>
    %82 = arith.divf %80, %81 : vector<8x32xf32>
    %83 = vector.extract_strided_slice %76 {offsets = [0, 32], sizes = [8, 32], strides = [1, 1]} : vector<8x128xf32> to vector<8x32xf32>
    %84 = math.tanh %83 : vector<8x32xf32>
    %85 = vector.extract_strided_slice %76 {offsets = [0, 64], sizes = [8, 32], strides = [1, 1]} : vector<8x128xf32> to vector<8x32xf32>
    %86 = arith.negf %85 : vector<8x32xf32>
    %87 = math.exp %86 : vector<8x32xf32>
    %cst_29 = arith.constant 1.000000e+00 : f32
    %88 = vector.broadcast %cst_29 : f32 to vector<8x32xf32>
    %89 = arith.addf %88, %87 : vector<8x32xf32>
    %90 = arith.divf %88, %89 : vector<8x32xf32>
    %91 = vector.extract_strided_slice %76 {offsets = [0, 96], sizes = [8, 32], strides = [1, 1]} : vector<8x128xf32> to vector<8x32xf32>
    %92 = arith.negf %91 : vector<8x32xf32>
    %93 = math.exp %92 : vector<8x32xf32>
    %cst_30 = arith.constant 1.000000e+00 : f32
    %94 = vector.broadcast %cst_30 : f32 to vector<8x32xf32>
    %95 = arith.addf %94, %93 : vector<8x32xf32>
    %96 = arith.divf %94, %95 : vector<8x32xf32>
    %97 = arith.mulf %90, %50 : vector<8x32xf32>
    %98 = arith.mulf %82, %84 : vector<8x32xf32>
    %99 = arith.addf %97, %98 : vector<8x32xf32>
    %100 = math.tanh %99 : vector<8x32xf32>
    %101 = arith.mulf %96, %100 : vector<8x32xf32>
    %102 = vector.broadcast %5 : vector<1x32xf32> to vector<8x32xf32>
    %103 = arith.mulf %101, %102 : vector<8x32xf32>
    %cst_31 = arith.constant dense<0.000000e+00> : vector<8xf32>
    %104 = vector.multi_reduction <add>, %103, %cst_31 [1] : vector<8x32xf32> to vector<8xf32>
    %105 = vector.shape_cast %104 : vector<8xf32> to vector<8x1xf32>
    %c2 = arith.constant 2 : index
    %c0_32 = arith.constant 0 : index
    %c0_33 = arith.constant 0 : index
    %106 = vector.load %arg1[%c2, %c0_32, %c0_33] : memref<8x8x50xf32, #tpu.memory_space<vmem>>, vector<1x8x50xf32>
    %107 = vector.shape_cast %106 : vector<1x8x50xf32> to vector<8x50xf32>
    %c2_34 = arith.constant 2 : index
    %c0_35 = arith.constant 0 : index
    %c0_36 = arith.constant 0 : index
    %108 = vector.load %arg2[%c2_34, %c0_35, %c0_36] : memref<8x8x4xf32, #tpu.memory_space<vmem>>, vector<1x8x4xf32>
    %109 = vector.shape_cast %108 : vector<1x8x4xf32> to vector<8x4xf32>
    %110 = vector.extract_strided_slice %109 {offsets = [0, 0], sizes = [8, 1], strides = [1, 1]} : vector<8x4xf32> to vector<8x1xf32>
    %111 = vector.broadcast %110 : vector<8x1xf32> to vector<8x32xf32>
    %112 = arith.mulf %111, %101 : vector<8x32xf32>
    %113 = vector.extract_strided_slice %109 {offsets = [0, 1], sizes = [8, 1], strides = [1, 1]} : vector<8x4xf32> to vector<8x1xf32>
    %114 = vector.broadcast %113 : vector<8x1xf32> to vector<8x32xf32>
    %115 = arith.mulf %114, %101 : vector<8x32xf32>
    %116 = vector.extract_strided_slice %109 {offsets = [0, 2], sizes = [8, 1], strides = [1, 1]} : vector<8x4xf32> to vector<8x1xf32>
    %117 = vector.broadcast %116 : vector<8x1xf32> to vector<8x32xf32>
    %118 = arith.mulf %117, %101 : vector<8x32xf32>
    %119 = vector.extract_strided_slice %109 {offsets = [0, 3], sizes = [8, 1], strides = [1, 1]} : vector<8x4xf32> to vector<8x1xf32>
    %120 = vector.broadcast %119 : vector<8x1xf32> to vector<8x32xf32>
    %121 = arith.mulf %120, %101 : vector<8x32xf32>
    %122 = tpu.concatenate %112, %115, %118, %121 in 1 : vector<8x32xf32>, vector<8x32xf32>, vector<8x32xf32>, vector<8x32xf32> -> vector<8x128xf32>
    %cst_37 = arith.constant dense<0.000000e+00> : vector<8x128xf32>
    %123 = tpu.matmul %107, %3, %cst_37 {dimension_numbers = #tpu.dot_dimension_numbers<[1], [0], [0], [1], [0, 0, 1, 1], [], []>} : vector<8x50xf32>, vector<50x128xf32>, vector<8x128xf32> -> vector<8x128xf32>
    %cst_38 = arith.constant dense<0.000000e+00> : vector<8x128xf32>
    %124 = tpu.matmul %122, %4, %cst_38 {dimension_numbers = #tpu.dot_dimension_numbers<[1], [0], [0], [1], [0, 0, 1, 1], [], []>} : vector<8x128xf32>, vector<128x128xf32>, vector<8x128xf32> -> vector<8x128xf32>
    %125 = arith.addf %123, %124 : vector<8x128xf32>
    %126 = vector.extract_strided_slice %125 {offsets = [0, 0], sizes = [8, 32], strides = [1, 1]} : vector<8x128xf32> to vector<8x32xf32>
    %127 = arith.negf %126 : vector<8x32xf32>
    %128 = math.exp %127 : vector<8x32xf32>
    %cst_39 = arith.constant 1.000000e+00 : f32
    %129 = vector.broadcast %cst_39 : f32 to vector<8x32xf32>
    %130 = arith.addf %129, %128 : vector<8x32xf32>
    %131 = arith.divf %129, %130 : vector<8x32xf32>
    %132 = vector.extract_strided_slice %125 {offsets = [0, 32], sizes = [8, 32], strides = [1, 1]} : vector<8x128xf32> to vector<8x32xf32>
    %133 = math.tanh %132 : vector<8x32xf32>
    %134 = vector.extract_strided_slice %125 {offsets = [0, 64], sizes = [8, 32], strides = [1, 1]} : vector<8x128xf32> to vector<8x32xf32>
    %135 = arith.negf %134 : vector<8x32xf32>
    %136 = math.exp %135 : vector<8x32xf32>
    %cst_40 = arith.constant 1.000000e+00 : f32
    %137 = vector.broadcast %cst_40 : f32 to vector<8x32xf32>
    %138 = arith.addf %137, %136 : vector<8x32xf32>
    %139 = arith.divf %137, %138 : vector<8x32xf32>
    %140 = vector.extract_strided_slice %125 {offsets = [0, 96], sizes = [8, 32], strides = [1, 1]} : vector<8x128xf32> to vector<8x32xf32>
    %141 = arith.negf %140 : vector<8x32xf32>
    %142 = math.exp %141 : vector<8x32xf32>
    %cst_41 = arith.constant 1.000000e+00 : f32
    %143 = vector.broadcast %cst_41 : f32 to vector<8x32xf32>
    %144 = arith.addf %143, %142 : vector<8x32xf32>
    %145 = arith.divf %143, %144 : vector<8x32xf32>
    %146 = arith.mulf %139, %99 : vector<8x32xf32>
    %147 = arith.mulf %131, %133 : vector<8x32xf32>
    %148 = arith.addf %146, %147 : vector<8x32xf32>
    %149 = math.tanh %148 : vector<8x32xf32>
    %150 = arith.mulf %145, %149 : vector<8x32xf32>
    %151 = vector.broadcast %5 : vector<1x32xf32> to vector<8x32xf32>
    %152 = arith.mulf %150, %151 : vector<8x32xf32>
    %cst_42 = arith.constant dense<0.000000e+00> : vector<8xf32>
    %153 = vector.multi_reduction <add>, %152, %cst_42 [1] : vector<8x32xf32> to vector<8xf32>
    %154 = vector.shape_cast %153 : vector<8xf32> to vector<8x1xf32>
    %c3 = arith.constant 3 : index
    %c0_43 = arith.constant 0 : index
    %c0_44 = arith.constant 0 : index
    %155 = vector.load %arg1[%c3, %c0_43, %c0_44] : memref<8x8x50xf32, #tpu.memory_space<vmem>>, vector<1x8x50xf32>
    %156 = vector.shape_cast %155 : vector<1x8x50xf32> to vector<8x50xf32>
    %c3_45 = arith.constant 3 : index
    %c0_46 = arith.constant 0 : index
    %c0_47 = arith.constant 0 : index
    %157 = vector.load %arg2[%c3_45, %c0_46, %c0_47] : memref<8x8x4xf32, #tpu.memory_space<vmem>>, vector<1x8x4xf32>
    %158 = vector.shape_cast %157 : vector<1x8x4xf32> to vector<8x4xf32>
    %159 = vector.extract_strided_slice %158 {offsets = [0, 0], sizes = [8, 1], strides = [1, 1]} : vector<8x4xf32> to vector<8x1xf32>
    %160 = vector.broadcast %159 : vector<8x1xf32> to vector<8x32xf32>
    %161 = arith.mulf %160, %150 : vector<8x32xf32>
    %162 = vector.extract_strided_slice %158 {offsets = [0, 1], sizes = [8, 1], strides = [1, 1]} : vector<8x4xf32> to vector<8x1xf32>
    %163 = vector.broadcast %162 : vector<8x1xf32> to vector<8x32xf32>
    %164 = arith.mulf %163, %150 : vector<8x32xf32>
    %165 = vector.extract_strided_slice %158 {offsets = [0, 2], sizes = [8, 1], strides = [1, 1]} : vector<8x4xf32> to vector<8x1xf32>
    %166 = vector.broadcast %165 : vector<8x1xf32> to vector<8x32xf32>
    %167 = arith.mulf %166, %150 : vector<8x32xf32>
    %168 = vector.extract_strided_slice %158 {offsets = [0, 3], sizes = [8, 1], strides = [1, 1]} : vector<8x4xf32> to vector<8x1xf32>
    %169 = vector.broadcast %168 : vector<8x1xf32> to vector<8x32xf32>
    %170 = arith.mulf %169, %150 : vector<8x32xf32>
    %171 = tpu.concatenate %161, %164, %167, %170 in 1 : vector<8x32xf32>, vector<8x32xf32>, vector<8x32xf32>, vector<8x32xf32> -> vector<8x128xf32>
    %cst_48 = arith.constant dense<0.000000e+00> : vector<8x128xf32>
    %172 = tpu.matmul %156, %3, %cst_48 {dimension_numbers = #tpu.dot_dimension_numbers<[1], [0], [0], [1], [0, 0, 1, 1], [], []>} : vector<8x50xf32>, vector<50x128xf32>, vector<8x128xf32> -> vector<8x128xf32>
    %cst_49 = arith.constant dense<0.000000e+00> : vector<8x128xf32>
    %173 = tpu.matmul %171, %4, %cst_49 {dimension_numbers = #tpu.dot_dimension_numbers<[1], [0], [0], [1], [0, 0, 1, 1], [], []>} : vector<8x128xf32>, vector<128x128xf32>, vector<8x128xf32> -> vector<8x128xf32>
    %174 = arith.addf %172, %173 : vector<8x128xf32>
    %175 = vector.extract_strided_slice %174 {offsets = [0, 0], sizes = [8, 32], strides = [1, 1]} : vector<8x128xf32> to vector<8x32xf32>
    %176 = arith.negf %175 : vector<8x32xf32>
    %177 = math.exp %176 : vector<8x32xf32>
    %cst_50 = arith.constant 1.000000e+00 : f32
    %178 = vector.broadcast %cst_50 : f32 to vector<8x32xf32>
    %179 = arith.addf %178, %177 : vector<8x32xf32>
    %180 = arith.divf %178, %179 : vector<8x32xf32>
    %181 = vector.extract_strided_slice %174 {offsets = [0, 32], sizes = [8, 32], strides = [1, 1]} : vector<8x128xf32> to vector<8x32xf32>
    %182 = math.tanh %181 : vector<8x32xf32>
    %183 = vector.extract_strided_slice %174 {offsets = [0, 64], sizes = [8, 32], strides = [1, 1]} : vector<8x128xf32> to vector<8x32xf32>
    %184 = arith.negf %183 : vector<8x32xf32>
    %185 = math.exp %184 : vector<8x32xf32>
    %cst_51 = arith.constant 1.000000e+00 : f32
    %186 = vector.broadcast %cst_51 : f32 to vector<8x32xf32>
    %187 = arith.addf %186, %185 : vector<8x32xf32>
    %188 = arith.divf %186, %187 : vector<8x32xf32>
    %189 = vector.extract_strided_slice %174 {offsets = [0, 96], sizes = [8, 32], strides = [1, 1]} : vector<8x128xf32> to vector<8x32xf32>
    %190 = arith.negf %189 : vector<8x32xf32>
    %191 = math.exp %190 : vector<8x32xf32>
    %cst_52 = arith.constant 1.000000e+00 : f32
    %192 = vector.broadcast %cst_52 : f32 to vector<8x32xf32>
    %193 = arith.addf %192, %191 : vector<8x32xf32>
    %194 = arith.divf %192, %193 : vector<8x32xf32>
    %195 = arith.mulf %188, %148 : vector<8x32xf32>
    %196 = arith.mulf %180, %182 : vector<8x32xf32>
    %197 = arith.addf %195, %196 : vector<8x32xf32>
    %198 = math.tanh %197 : vector<8x32xf32>
    %199 = arith.mulf %194, %198 : vector<8x32xf32>
    %200 = vector.broadcast %5 : vector<1x32xf32> to vector<8x32xf32>
    %201 = arith.mulf %199, %200 : vector<8x32xf32>
    %cst_53 = arith.constant dense<0.000000e+00> : vector<8xf32>
    %202 = vector.multi_reduction <add>, %201, %cst_53 [1] : vector<8x32xf32> to vector<8xf32>
    %203 = vector.shape_cast %202 : vector<8xf32> to vector<8x1xf32>
    %c4 = arith.constant 4 : index
    %c0_54 = arith.constant 0 : index
    %c0_55 = arith.constant 0 : index
    %204 = vector.load %arg1[%c4, %c0_54, %c0_55] : memref<8x8x50xf32, #tpu.memory_space<vmem>>, vector<1x8x50xf32>
    %205 = vector.shape_cast %204 : vector<1x8x50xf32> to vector<8x50xf32>
    %c4_56 = arith.constant 4 : index
    %c0_57 = arith.constant 0 : index
    %c0_58 = arith.constant 0 : index
    %206 = vector.load %arg2[%c4_56, %c0_57, %c0_58] : memref<8x8x4xf32, #tpu.memory_space<vmem>>, vector<1x8x4xf32>
    %207 = vector.shape_cast %206 : vector<1x8x4xf32> to vector<8x4xf32>
    %208 = vector.extract_strided_slice %207 {offsets = [0, 0], sizes = [8, 1], strides = [1, 1]} : vector<8x4xf32> to vector<8x1xf32>
    %209 = vector.broadcast %208 : vector<8x1xf32> to vector<8x32xf32>
    %210 = arith.mulf %209, %199 : vector<8x32xf32>
    %211 = vector.extract_strided_slice %207 {offsets = [0, 1], sizes = [8, 1], strides = [1, 1]} : vector<8x4xf32> to vector<8x1xf32>
    %212 = vector.broadcast %211 : vector<8x1xf32> to vector<8x32xf32>
    %213 = arith.mulf %212, %199 : vector<8x32xf32>
    %214 = vector.extract_strided_slice %207 {offsets = [0, 2], sizes = [8, 1], strides = [1, 1]} : vector<8x4xf32> to vector<8x1xf32>
    %215 = vector.broadcast %214 : vector<8x1xf32> to vector<8x32xf32>
    %216 = arith.mulf %215, %199 : vector<8x32xf32>
    %217 = vector.extract_strided_slice %207 {offsets = [0, 3], sizes = [8, 1], strides = [1, 1]} : vector<8x4xf32> to vector<8x1xf32>
    %218 = vector.broadcast %217 : vector<8x1xf32> to vector<8x32xf32>
    %219 = arith.mulf %218, %199 : vector<8x32xf32>
    %220 = tpu.concatenate %210, %213, %216, %219 in 1 : vector<8x32xf32>, vector<8x32xf32>, vector<8x32xf32>, vector<8x32xf32> -> vector<8x128xf32>
    %cst_59 = arith.constant dense<0.000000e+00> : vector<8x128xf32>
    %221 = tpu.matmul %205, %3, %cst_59 {dimension_numbers = #tpu.dot_dimension_numbers<[1], [0], [0], [1], [0, 0, 1, 1], [], []>} : vector<8x50xf32>, vector<50x128xf32>, vector<8x128xf32> -> vector<8x128xf32>
    %cst_60 = arith.constant dense<0.000000e+00> : vector<8x128xf32>
    %222 = tpu.matmul %220, %4, %cst_60 {dimension_numbers = #tpu.dot_dimension_numbers<[1], [0], [0], [1], [0, 0, 1, 1], [], []>} : vector<8x128xf32>, vector<128x128xf32>, vector<8x128xf32> -> vector<8x128xf32>
    %223 = arith.addf %221, %222 : vector<8x128xf32>
    %224 = vector.extract_strided_slice %223 {offsets = [0, 0], sizes = [8, 32], strides = [1, 1]} : vector<8x128xf32> to vector<8x32xf32>
    %225 = arith.negf %224 : vector<8x32xf32>
    %226 = math.exp %225 : vector<8x32xf32>
    %cst_61 = arith.constant 1.000000e+00 : f32
    %227 = vector.broadcast %cst_61 : f32 to vector<8x32xf32>
    %228 = arith.addf %227, %226 : vector<8x32xf32>
    %229 = arith.divf %227, %228 : vector<8x32xf32>
    %230 = vector.extract_strided_slice %223 {offsets = [0, 32], sizes = [8, 32], strides = [1, 1]} : vector<8x128xf32> to vector<8x32xf32>
    %231 = math.tanh %230 : vector<8x32xf32>
    %232 = vector.extract_strided_slice %223 {offsets = [0, 64], sizes = [8, 32], strides = [1, 1]} : vector<8x128xf32> to vector<8x32xf32>
    %233 = arith.negf %232 : vector<8x32xf32>
    %234 = math.exp %233 : vector<8x32xf32>
    %cst_62 = arith.constant 1.000000e+00 : f32
    %235 = vector.broadcast %cst_62 : f32 to vector<8x32xf32>
    %236 = arith.addf %235, %234 : vector<8x32xf32>
    %237 = arith.divf %235, %236 : vector<8x32xf32>
    %238 = vector.extract_strided_slice %223 {offsets = [0, 96], sizes = [8, 32], strides = [1, 1]} : vector<8x128xf32> to vector<8x32xf32>
    %239 = arith.negf %238 : vector<8x32xf32>
    %240 = math.exp %239 : vector<8x32xf32>
    %cst_63 = arith.constant 1.000000e+00 : f32
    %241 = vector.broadcast %cst_63 : f32 to vector<8x32xf32>
    %242 = arith.addf %241, %240 : vector<8x32xf32>
    %243 = arith.divf %241, %242 : vector<8x32xf32>
    %244 = arith.mulf %237, %197 : vector<8x32xf32>
    %245 = arith.mulf %229, %231 : vector<8x32xf32>
    %246 = arith.addf %244, %245 : vector<8x32xf32>
    %247 = math.tanh %246 : vector<8x32xf32>
    %248 = arith.mulf %243, %247 : vector<8x32xf32>
    %249 = vector.broadcast %5 : vector<1x32xf32> to vector<8x32xf32>
    %250 = arith.mulf %248, %249 : vector<8x32xf32>
    %cst_64 = arith.constant dense<0.000000e+00> : vector<8xf32>
    %251 = vector.multi_reduction <add>, %250, %cst_64 [1] : vector<8x32xf32> to vector<8xf32>
    %252 = vector.shape_cast %251 : vector<8xf32> to vector<8x1xf32>
    %c5 = arith.constant 5 : index
    %c0_65 = arith.constant 0 : index
    %c0_66 = arith.constant 0 : index
    %253 = vector.load %arg1[%c5, %c0_65, %c0_66] : memref<8x8x50xf32, #tpu.memory_space<vmem>>, vector<1x8x50xf32>
    %254 = vector.shape_cast %253 : vector<1x8x50xf32> to vector<8x50xf32>
    %c5_67 = arith.constant 5 : index
    %c0_68 = arith.constant 0 : index
    %c0_69 = arith.constant 0 : index
    %255 = vector.load %arg2[%c5_67, %c0_68, %c0_69] : memref<8x8x4xf32, #tpu.memory_space<vmem>>, vector<1x8x4xf32>
    %256 = vector.shape_cast %255 : vector<1x8x4xf32> to vector<8x4xf32>
    %257 = vector.extract_strided_slice %256 {offsets = [0, 0], sizes = [8, 1], strides = [1, 1]} : vector<8x4xf32> to vector<8x1xf32>
    %258 = vector.broadcast %257 : vector<8x1xf32> to vector<8x32xf32>
    %259 = arith.mulf %258, %248 : vector<8x32xf32>
    %260 = vector.extract_strided_slice %256 {offsets = [0, 1], sizes = [8, 1], strides = [1, 1]} : vector<8x4xf32> to vector<8x1xf32>
    %261 = vector.broadcast %260 : vector<8x1xf32> to vector<8x32xf32>
    %262 = arith.mulf %261, %248 : vector<8x32xf32>
    %263 = vector.extract_strided_slice %256 {offsets = [0, 2], sizes = [8, 1], strides = [1, 1]} : vector<8x4xf32> to vector<8x1xf32>
    %264 = vector.broadcast %263 : vector<8x1xf32> to vector<8x32xf32>
    %265 = arith.mulf %264, %248 : vector<8x32xf32>
    %266 = vector.extract_strided_slice %256 {offsets = [0, 3], sizes = [8, 1], strides = [1, 1]} : vector<8x4xf32> to vector<8x1xf32>
    %267 = vector.broadcast %266 : vector<8x1xf32> to vector<8x32xf32>
    %268 = arith.mulf %267, %248 : vector<8x32xf32>
    %269 = tpu.concatenate %259, %262, %265, %268 in 1 : vector<8x32xf32>, vector<8x32xf32>, vector<8x32xf32>, vector<8x32xf32> -> vector<8x128xf32>
    %cst_70 = arith.constant dense<0.000000e+00> : vector<8x128xf32>
    %270 = tpu.matmul %254, %3, %cst_70 {dimension_numbers = #tpu.dot_dimension_numbers<[1], [0], [0], [1], [0, 0, 1, 1], [], []>} : vector<8x50xf32>, vector<50x128xf32>, vector<8x128xf32> -> vector<8x128xf32>
    %cst_71 = arith.constant dense<0.000000e+00> : vector<8x128xf32>
    %271 = tpu.matmul %269, %4, %cst_71 {dimension_numbers = #tpu.dot_dimension_numbers<[1], [0], [0], [1], [0, 0, 1, 1], [], []>} : vector<8x128xf32>, vector<128x128xf32>, vector<8x128xf32> -> vector<8x128xf32>
    %272 = arith.addf %270, %271 : vector<8x128xf32>
    %273 = vector.extract_strided_slice %272 {offsets = [0, 0], sizes = [8, 32], strides = [1, 1]} : vector<8x128xf32> to vector<8x32xf32>
    %274 = arith.negf %273 : vector<8x32xf32>
    %275 = math.exp %274 : vector<8x32xf32>
    %cst_72 = arith.constant 1.000000e+00 : f32
    %276 = vector.broadcast %cst_72 : f32 to vector<8x32xf32>
    %277 = arith.addf %276, %275 : vector<8x32xf32>
    %278 = arith.divf %276, %277 : vector<8x32xf32>
    %279 = vector.extract_strided_slice %272 {offsets = [0, 32], sizes = [8, 32], strides = [1, 1]} : vector<8x128xf32> to vector<8x32xf32>
    %280 = math.tanh %279 : vector<8x32xf32>
    %281 = vector.extract_strided_slice %272 {offsets = [0, 64], sizes = [8, 32], strides = [1, 1]} : vector<8x128xf32> to vector<8x32xf32>
    %282 = arith.negf %281 : vector<8x32xf32>
    %283 = math.exp %282 : vector<8x32xf32>
    %cst_73 = arith.constant 1.000000e+00 : f32
    %284 = vector.broadcast %cst_73 : f32 to vector<8x32xf32>
    %285 = arith.addf %284, %283 : vector<8x32xf32>
    %286 = arith.divf %284, %285 : vector<8x32xf32>
    %287 = vector.extract_strided_slice %272 {offsets = [0, 96], sizes = [8, 32], strides = [1, 1]} : vector<8x128xf32> to vector<8x32xf32>
    %288 = arith.negf %287 : vector<8x32xf32>
    %289 = math.exp %288 : vector<8x32xf32>
    %cst_74 = arith.constant 1.000000e+00 : f32
    %290 = vector.broadcast %cst_74 : f32 to vector<8x32xf32>
    %291 = arith.addf %290, %289 : vector<8x32xf32>
    %292 = arith.divf %290, %291 : vector<8x32xf32>
    %293 = arith.mulf %286, %246 : vector<8x32xf32>
    %294 = arith.mulf %278, %280 : vector<8x32xf32>
    %295 = arith.addf %293, %294 : vector<8x32xf32>
    %296 = math.tanh %295 : vector<8x32xf32>
    %297 = arith.mulf %292, %296 : vector<8x32xf32>
    %298 = vector.broadcast %5 : vector<1x32xf32> to vector<8x32xf32>
    %299 = arith.mulf %297, %298 : vector<8x32xf32>
    %cst_75 = arith.constant dense<0.000000e+00> : vector<8xf32>
    %300 = vector.multi_reduction <add>, %299, %cst_75 [1] : vector<8x32xf32> to vector<8xf32>
    %301 = vector.shape_cast %300 : vector<8xf32> to vector<8x1xf32>
    %c6 = arith.constant 6 : index
    %c0_76 = arith.constant 0 : index
    %c0_77 = arith.constant 0 : index
    %302 = vector.load %arg1[%c6, %c0_76, %c0_77] : memref<8x8x50xf32, #tpu.memory_space<vmem>>, vector<1x8x50xf32>
    %303 = vector.shape_cast %302 : vector<1x8x50xf32> to vector<8x50xf32>
    %c6_78 = arith.constant 6 : index
    %c0_79 = arith.constant 0 : index
    %c0_80 = arith.constant 0 : index
    %304 = vector.load %arg2[%c6_78, %c0_79, %c0_80] : memref<8x8x4xf32, #tpu.memory_space<vmem>>, vector<1x8x4xf32>
    %305 = vector.shape_cast %304 : vector<1x8x4xf32> to vector<8x4xf32>
    %306 = vector.extract_strided_slice %305 {offsets = [0, 0], sizes = [8, 1], strides = [1, 1]} : vector<8x4xf32> to vector<8x1xf32>
    %307 = vector.broadcast %306 : vector<8x1xf32> to vector<8x32xf32>
    %308 = arith.mulf %307, %297 : vector<8x32xf32>
    %309 = vector.extract_strided_slice %305 {offsets = [0, 1], sizes = [8, 1], strides = [1, 1]} : vector<8x4xf32> to vector<8x1xf32>
    %310 = vector.broadcast %309 : vector<8x1xf32> to vector<8x32xf32>
    %311 = arith.mulf %310, %297 : vector<8x32xf32>
    %312 = vector.extract_strided_slice %305 {offsets = [0, 2], sizes = [8, 1], strides = [1, 1]} : vector<8x4xf32> to vector<8x1xf32>
    %313 = vector.broadcast %312 : vector<8x1xf32> to vector<8x32xf32>
    %314 = arith.mulf %313, %297 : vector<8x32xf32>
    %315 = vector.extract_strided_slice %305 {offsets = [0, 3], sizes = [8, 1], strides = [1, 1]} : vector<8x4xf32> to vector<8x1xf32>
    %316 = vector.broadcast %315 : vector<8x1xf32> to vector<8x32xf32>
    %317 = arith.mulf %316, %297 : vector<8x32xf32>
    %318 = tpu.concatenate %308, %311, %314, %317 in 1 : vector<8x32xf32>, vector<8x32xf32>, vector<8x32xf32>, vector<8x32xf32> -> vector<8x128xf32>
    %cst_81 = arith.constant dense<0.000000e+00> : vector<8x128xf32>
    %319 = tpu.matmul %303, %3, %cst_81 {dimension_numbers = #tpu.dot_dimension_numbers<[1], [0], [0], [1], [0, 0, 1, 1], [], []>} : vector<8x50xf32>, vector<50x128xf32>, vector<8x128xf32> -> vector<8x128xf32>
    %cst_82 = arith.constant dense<0.000000e+00> : vector<8x128xf32>
    %320 = tpu.matmul %318, %4, %cst_82 {dimension_numbers = #tpu.dot_dimension_numbers<[1], [0], [0], [1], [0, 0, 1, 1], [], []>} : vector<8x128xf32>, vector<128x128xf32>, vector<8x128xf32> -> vector<8x128xf32>
    %321 = arith.addf %319, %320 : vector<8x128xf32>
    %322 = vector.extract_strided_slice %321 {offsets = [0, 0], sizes = [8, 32], strides = [1, 1]} : vector<8x128xf32> to vector<8x32xf32>
    %323 = arith.negf %322 : vector<8x32xf32>
    %324 = math.exp %323 : vector<8x32xf32>
    %cst_83 = arith.constant 1.000000e+00 : f32
    %325 = vector.broadcast %cst_83 : f32 to vector<8x32xf32>
    %326 = arith.addf %325, %324 : vector<8x32xf32>
    %327 = arith.divf %325, %326 : vector<8x32xf32>
    %328 = vector.extract_strided_slice %321 {offsets = [0, 32], sizes = [8, 32], strides = [1, 1]} : vector<8x128xf32> to vector<8x32xf32>
    %329 = math.tanh %328 : vector<8x32xf32>
    %330 = vector.extract_strided_slice %321 {offsets = [0, 64], sizes = [8, 32], strides = [1, 1]} : vector<8x128xf32> to vector<8x32xf32>
    %331 = arith.negf %330 : vector<8x32xf32>
    %332 = math.exp %331 : vector<8x32xf32>
    %cst_84 = arith.constant 1.000000e+00 : f32
    %333 = vector.broadcast %cst_84 : f32 to vector<8x32xf32>
    %334 = arith.addf %333, %332 : vector<8x32xf32>
    %335 = arith.divf %333, %334 : vector<8x32xf32>
    %336 = vector.extract_strided_slice %321 {offsets = [0, 96], sizes = [8, 32], strides = [1, 1]} : vector<8x128xf32> to vector<8x32xf32>
    %337 = arith.negf %336 : vector<8x32xf32>
    %338 = math.exp %337 : vector<8x32xf32>
    %cst_85 = arith.constant 1.000000e+00 : f32
    %339 = vector.broadcast %cst_85 : f32 to vector<8x32xf32>
    %340 = arith.addf %339, %338 : vector<8x32xf32>
    %341 = arith.divf %339, %340 : vector<8x32xf32>
    %342 = arith.mulf %335, %295 : vector<8x32xf32>
    %343 = arith.mulf %327, %329 : vector<8x32xf32>
    %344 = arith.addf %342, %343 : vector<8x32xf32>
    %345 = math.tanh %344 : vector<8x32xf32>
    %346 = arith.mulf %341, %345 : vector<8x32xf32>
    %347 = vector.broadcast %5 : vector<1x32xf32> to vector<8x32xf32>
    %348 = arith.mulf %346, %347 : vector<8x32xf32>
    %cst_86 = arith.constant dense<0.000000e+00> : vector<8xf32>
    %349 = vector.multi_reduction <add>, %348, %cst_86 [1] : vector<8x32xf32> to vector<8xf32>
    %350 = vector.shape_cast %349 : vector<8xf32> to vector<8x1xf32>
    %c7 = arith.constant 7 : index
    %c0_87 = arith.constant 0 : index
    %c0_88 = arith.constant 0 : index
    %351 = vector.load %arg1[%c7, %c0_87, %c0_88] : memref<8x8x50xf32, #tpu.memory_space<vmem>>, vector<1x8x50xf32>
    %352 = vector.shape_cast %351 : vector<1x8x50xf32> to vector<8x50xf32>
    %c7_89 = arith.constant 7 : index
    %c0_90 = arith.constant 0 : index
    %c0_91 = arith.constant 0 : index
    %353 = vector.load %arg2[%c7_89, %c0_90, %c0_91] : memref<8x8x4xf32, #tpu.memory_space<vmem>>, vector<1x8x4xf32>
    %354 = vector.shape_cast %353 : vector<1x8x4xf32> to vector<8x4xf32>
    %355 = vector.extract_strided_slice %354 {offsets = [0, 0], sizes = [8, 1], strides = [1, 1]} : vector<8x4xf32> to vector<8x1xf32>
    %356 = vector.broadcast %355 : vector<8x1xf32> to vector<8x32xf32>
    %357 = arith.mulf %356, %346 : vector<8x32xf32>
    %358 = vector.extract_strided_slice %354 {offsets = [0, 1], sizes = [8, 1], strides = [1, 1]} : vector<8x4xf32> to vector<8x1xf32>
    %359 = vector.broadcast %358 : vector<8x1xf32> to vector<8x32xf32>
    %360 = arith.mulf %359, %346 : vector<8x32xf32>
    %361 = vector.extract_strided_slice %354 {offsets = [0, 2], sizes = [8, 1], strides = [1, 1]} : vector<8x4xf32> to vector<8x1xf32>
    %362 = vector.broadcast %361 : vector<8x1xf32> to vector<8x32xf32>
    %363 = arith.mulf %362, %346 : vector<8x32xf32>
    %364 = vector.extract_strided_slice %354 {offsets = [0, 3], sizes = [8, 1], strides = [1, 1]} : vector<8x4xf32> to vector<8x1xf32>
    %365 = vector.broadcast %364 : vector<8x1xf32> to vector<8x32xf32>
    %366 = arith.mulf %365, %346 : vector<8x32xf32>
    %367 = tpu.concatenate %357, %360, %363, %366 in 1 : vector<8x32xf32>, vector<8x32xf32>, vector<8x32xf32>, vector<8x32xf32> -> vector<8x128xf32>
    %cst_92 = arith.constant dense<0.000000e+00> : vector<8x128xf32>
    %368 = tpu.matmul %352, %3, %cst_92 {dimension_numbers = #tpu.dot_dimension_numbers<[1], [0], [0], [1], [0, 0, 1, 1], [], []>} : vector<8x50xf32>, vector<50x128xf32>, vector<8x128xf32> -> vector<8x128xf32>
    %cst_93 = arith.constant dense<0.000000e+00> : vector<8x128xf32>
    %369 = tpu.matmul %367, %4, %cst_93 {dimension_numbers = #tpu.dot_dimension_numbers<[1], [0], [0], [1], [0, 0, 1, 1], [], []>} : vector<8x128xf32>, vector<128x128xf32>, vector<8x128xf32> -> vector<8x128xf32>
    %370 = arith.addf %368, %369 : vector<8x128xf32>
    %371 = vector.extract_strided_slice %370 {offsets = [0, 0], sizes = [8, 32], strides = [1, 1]} : vector<8x128xf32> to vector<8x32xf32>
    %372 = arith.negf %371 : vector<8x32xf32>
    %373 = math.exp %372 : vector<8x32xf32>
    %cst_94 = arith.constant 1.000000e+00 : f32
    %374 = vector.broadcast %cst_94 : f32 to vector<8x32xf32>
    %375 = arith.addf %374, %373 : vector<8x32xf32>
    %376 = arith.divf %374, %375 : vector<8x32xf32>
    %377 = vector.extract_strided_slice %370 {offsets = [0, 32], sizes = [8, 32], strides = [1, 1]} : vector<8x128xf32> to vector<8x32xf32>
    %378 = math.tanh %377 : vector<8x32xf32>
    %379 = vector.extract_strided_slice %370 {offsets = [0, 64], sizes = [8, 32], strides = [1, 1]} : vector<8x128xf32> to vector<8x32xf32>
    %380 = arith.negf %379 : vector<8x32xf32>
    %381 = math.exp %380 : vector<8x32xf32>
    %cst_95 = arith.constant 1.000000e+00 : f32
    %382 = vector.broadcast %cst_95 : f32 to vector<8x32xf32>
    %383 = arith.addf %382, %381 : vector<8x32xf32>
    %384 = arith.divf %382, %383 : vector<8x32xf32>
    %385 = vector.extract_strided_slice %370 {offsets = [0, 96], sizes = [8, 32], strides = [1, 1]} : vector<8x128xf32> to vector<8x32xf32>
    %386 = arith.negf %385 : vector<8x32xf32>
    %387 = math.exp %386 : vector<8x32xf32>
    %cst_96 = arith.constant 1.000000e+00 : f32
    %388 = vector.broadcast %cst_96 : f32 to vector<8x32xf32>
    %389 = arith.addf %388, %387 : vector<8x32xf32>
    %390 = arith.divf %388, %389 : vector<8x32xf32>
    %391 = arith.mulf %384, %344 : vector<8x32xf32>
    %392 = arith.mulf %376, %378 : vector<8x32xf32>
    %393 = arith.addf %391, %392 : vector<8x32xf32>
    %394 = math.tanh %393 : vector<8x32xf32>
    %395 = arith.mulf %390, %394 : vector<8x32xf32>
    %396 = vector.broadcast %5 : vector<1x32xf32> to vector<8x32xf32>
    %397 = arith.mulf %395, %396 : vector<8x32xf32>
    %cst_97 = arith.constant dense<0.000000e+00> : vector<8xf32>
    %398 = vector.multi_reduction <add>, %397, %cst_97 [1] : vector<8x32xf32> to vector<8xf32>
    %399 = vector.shape_cast %398 : vector<8xf32> to vector<8x1xf32>
    %c0_98 = arith.constant 0 : index
    %c0_99 = arith.constant 0 : index
    %400 = vector.load %arg8[%c0_98, %c0_99] : memref<8x32xf32, #tpu.memory_space<vmem>>, vector<8x32xf32>
    tpu.vector_store %arg8[%c0_98, %c0_99], %395 {strides = array<i32>} : memref<8x32xf32, #tpu.memory_space<vmem>>, vector<8x32xf32>,
    %c0_100 = arith.constant 0 : index
    %c0_101 = arith.constant 0 : index
    %401 = vector.load %arg9[%c0_100, %c0_101] : memref<8x32xf32, #tpu.memory_space<vmem>>, vector<8x32xf32>
    tpu.vector_store %arg9[%c0_100, %c0_101], %393 {strides = array<i32>} : memref<8x32xf32, #tpu.memory_space<vmem>>, vector<8x32xf32>,
    %402 = tpu.concatenate %56, %105, %154, %203, %252, %301, %350, %399 in 1 : vector<8x1xf32>, vector<8x1xf32>, vector<8x1xf32>, vector<8x1xf32>, vector<8x1xf32>, vector<8x1xf32>, vector<8x1xf32>, vector<8x1xf32> -> vector<8x8xf32>
    %c0_102 = arith.constant 0 : index
    %c0_103 = arith.constant 0 : index
    %c0_104 = arith.constant 0 : index
    %403 = vector.load %arg3[%c0_102, %c0_103, %c0_104] : memref<1x8x8xf32, #tpu.memory_space<vmem>>, vector<1x8x8xf32>
    %404 = vector.shape_cast %403 : vector<1x8x8xf32> to vector<8x8xf32>
    %405 = arith.addf %402, %404 : vector<8x8xf32>
    %406 = arith.negf %405 : vector<8x8xf32>
    %407 = math.exp %406 : vector<8x8xf32>
    %cst_105 = arith.constant 1.000000e+00 : f32
    %408 = vector.broadcast %cst_105 : f32 to vector<8x8xf32>
    %409 = arith.addf %408, %407 : vector<8x8xf32>
    %410 = arith.divf %408, %409 : vector<8x8xf32>
    %c0_106 = arith.constant 0 : index
    %c0_107 = arith.constant 0 : index
    %c0_108 = arith.constant 0 : index
    %411 = vector.load %arg7[%c0_106, %c0_107, %c0_108] : memref<1x8x8xf32, #tpu.memory_space<vmem>>, vector<1x8x8xf32>
    %412 = vector.shape_cast %411 : vector<1x8x8xf32> to vector<8x8xf32>
    %413 = vector.shape_cast %410 : vector<8x8xf32> to vector<1x8x8xf32>
    tpu.vector_store %arg7[%c0_106, %c0_107, %c0_108], %413 {strides = array<i32>} : memref<1x8x8xf32, #tpu.memory_space<vmem>>, vector<1x8x8xf32>,
    return
  }
  func.func @transform_0(%arg0: i32) -> (i32, i32, i32) {
    %c0_i32 = arith.constant 0 : i32
    %c0_i32_0 = arith.constant 0 : i32
    %c0_i32_1 = arith.constant 0 : i32
    return %arg0, %c0_i32, %c0_i32_0 : i32, i32, i32
  }
  func.func @transform_1(%arg0: i32) -> (i32, i32, i32) {
    %c0_i32 = arith.constant 0 : i32
    %c0_i32_0 = arith.constant 0 : i32
    %c0_i32_1 = arith.constant 0 : i32
    return %arg0, %c0_i32, %c0_i32_0 : i32, i32, i32
  }
  func.func @transform_2(%arg0: i32) -> (i32, i32, i32) {
    %c0_i32 = arith.constant 0 : i32
    %c0_i32_0 = arith.constant 0 : i32
    %c0_i32_1 = arith.constant 0 : i32
    return %arg0, %c0_i32, %c0_i32_0 : i32, i32, i32
  }
  func.func @transform_3(%arg0: i32) -> (i32, i32) {
    %c0_i32 = arith.constant 0 : i32
    %c0_i32_0 = arith.constant 0 : i32
    %c0_i32_1 = arith.constant 0 : i32
    return %c0_i32, %c0_i32_0 : i32, i32
  }
  func.func @transform_4(%arg0: i32) -> (i32, i32) {
    %c0_i32 = arith.constant 0 : i32
    %c0_i32_0 = arith.constant 0 : i32
    %c0_i32_1 = arith.constant 0 : i32
    return %c0_i32, %c0_i32_0 : i32, i32
  }
  func.func @transform_5(%arg0: i32) -> (i32, i32) {
    %c0_i32 = arith.constant 0 : i32
    %c0_i32_0 = arith.constant 0 : i32
    %c0_i32_1 = arith.constant 0 : i32
    return %c0_i32, %c0_i32_0 : i32, i32
  }
  func.func @transform_6(%arg0: i32) -> (i32, i32, i32) {
    %c0_i32 = arith.constant 0 : i32
    %c0_i32_0 = arith.constant 0 : i32
    %c0_i32_1 = arith.constant 0 : i32
    return %arg0, %c0_i32, %c0_i32_0 : i32, i32, i32
  }
}

</mosaic_0001>

<llo_original>
// kernel: tpu_custom_call.1
$region0: #{tpu_custom_call.1}
  #allocation0 [shape = 'u32[]', space=smem, size = 0x4, offset = 0x4, fixed_abs, tag = 'smem constant byte address 0x4 - core index']
  #allocation1 [shape = 'u32[72,128]{1,0:T(1,128)}', space=vmem, size = 0x9000, scoped, tag = 'internal scratch']
  #allocation2 [shape = 'f32[8,32]{1,0:T(8,128)}', space=vmem, size = 0x1000, scoped, tag = 'scratch operand']
  #allocation3 [shape = 'f32[8,32]{1,0:T(8,128)}', space=vmem, size = 0x1000, scoped, tag = 'scratch operand']
  %s0 = inlined_call_operand.vmem [shape: f32[8,8,50], index: 0, kind: input, shape index: {}]
  %s1 = inlined_call_operand.vmem [shape: f32[8,8,4], index: 1, kind: input, shape index: {}]
  %s2 = inlined_call_operand.vmem [shape: f32[1,8,8], index: 2, kind: input, shape index: {}]
  %s3 = inlined_call_operand.hbm [shape: f32[50,128], index: 3, kind: input, shape index: {}]
  %s4 = inlined_call_operand.hbm [shape: f32[128,128], index: 4, kind: input, shape index: {}]
  %s5 = inlined_call_operand.vmem [shape: f32[1,32], index: 5, kind: input, shape index: {}]
  %s6 = inlined_call_operand.hbm [shape: f32[1,8,8], index: 6, kind: output, shape index: {}]
  %s7 = sld [smem:[#allocation0]]
  $region46: #{tpu_custom_call.1} parent=0
    _
  %s9 = ssub.s32 1, %s7
  %s10 = scalar_select 0, %s9, %s7
  $region1: #{tpu_custom_call.1} parent=0
    #allocation4 [shape = 'u8[28672]{0}', space=vmem, size = 0x7000, scoped, tag = 'input window, operand 3, single buffered']
    #allocation5 [shape = 's32[1]{0}', space=sflag, size = 0x4, scoped, tag = 'scoped memory for tpu_custom_call.1']
    #allocation6 [shape = 's32[1]{0}', space=sflag, size = 0x4, scoped, tag = 'scoped memory for tpu_custom_call.1']
    #allocation7 [shape = 'u8[65536]{0}', space=vmem, size = 0x10000, scoped, tag = 'input window, operand 4, single buffered']
    #allocation8 [shape = 's32[1]{0}', space=sflag, size = 0x4, scoped, tag = 'scoped memory for tpu_custom_call.1']
    #allocation9 [shape = 'u8[4096]{0}', space=vmem, size = 0x1000, scoped, tag = 'output window, operand 0, single buffered']
    %11 = vsyncpa [#allocation5], 0
    %12 = vsyncpa [#allocation8], 0
    %13 = vsyncpa [#allocation6], 0
    // Predicated region
    $region2: #{tpu_custom_call.1} parent=1 // pred_check
      _
    $region3: #{tpu_custom_call.1} parent=1 // pred_check_branch
      %15 = sbr.rel (0) target = $region5
    $region4: #{tpu_custom_call.1} parent=1 // pred_region
      _
    $region5: #{tpu_custom_call.1} parent=1 // pred_fallthru
      _
    // Predicated region
    $region6: #{tpu_custom_call.1} parent=1 // pred_check
      _
    $region7: #{tpu_custom_call.1} parent=1 // pred_check_branch
      %17 = sbr.rel (0) target = $region9
    $region8: #{tpu_custom_call.1} parent=1 // pred_region
      _
    $region9: #{tpu_custom_call.1} parent=1 // pred_fallthru
      _
    // Predicated region
    $region10: #{tpu_custom_call.1} parent=1 // pred_check
      _
    $region11: #{tpu_custom_call.1} parent=1 // pred_check_branch
      %19 = sbr.rel (0) target = $region13
    $region12: #{tpu_custom_call.1} parent=1 // pred_region
      _
    $region13: #{tpu_custom_call.1} parent=1 // pred_fallthru
      _
    // Predicated region
    $region14: #{tpu_custom_call.1} parent=1 // pred_check
      _
    $region15: #{tpu_custom_call.1} parent=1 // pred_check_branch
      %21 = sbr.rel (0) target = $region17
    $region16: #{tpu_custom_call.1} parent=1 // pred_region
      %23 = vsyncadd [#allocation5], 0
      %s24 = sshll.u32 %s3, 4
      %s25 = int_to_ptr.hbm [resolvable:$true] %s24
      %s26 = sshll.u32 [#allocation4], 4
      %s27 = int_to_ptr.vmem [resolvable:$true] %s26
      %32 = dma.hbm_to_vmem [thread:$0]  %s25, 896, %s27, [#allocation5], 128, 128, 8
    $region17: #{tpu_custom_call.1} parent=1 // pred_fallthru
      _
    // Predicated region
    $region18: #{tpu_custom_call.1} parent=1 // pred_check
      _
    $region19: #{tpu_custom_call.1} parent=1 // pred_check_branch
      %34 = sbr.rel (0) target = $region21
    $region20: #{tpu_custom_call.1} parent=1 // pred_region
      %36 = vsyncadd [#allocation8], 0
      %s37 = sshll.u32 %s4, 4
      %s38 = int_to_ptr.hbm [resolvable:$true] %s37
      %s39 = sshll.u32 [#allocation7], 4
      %s40 = int_to_ptr.vmem [resolvable:$true] %s39
      %45 = dma.hbm_to_vmem [thread:$0]  %s38, 2048, %s40, [#allocation8], 128, 128, 8
    $region21: #{tpu_custom_call.1} parent=1 // pred_fallthru
      _
    // Predicated region
    $region22: #{tpu_custom_call.1} parent=1 // pred_check
      _
    $region23: #{tpu_custom_call.1} parent=1 // pred_check_branch
      %47 = sbr.rel (0) target = $region25
    $region24: #{tpu_custom_call.1} parent=1 // pred_region
      _
    $region25: #{tpu_custom_call.1} parent=1 // pred_fallthru
      _
    // Predicated region
    $region26: #{tpu_custom_call.1} parent=1 // pred_check
      _
    $region27: #{tpu_custom_call.1} parent=1 // pred_check_branch
      %49 = sbr.rel (0) target = $region29
    $region28: #{tpu_custom_call.1} parent=1 // pred_region
      %51 = dma.done [#allocation5], 896
    $region29: #{tpu_custom_call.1} parent=1 // pred_fallthru
      _
    // Predicated region
    $region30: #{tpu_custom_call.1} parent=1 // pred_check
      _
    $region31: #{tpu_custom_call.1} parent=1 // pred_check_branch
      %53 = sbr.rel (0) target = $region33
    $region32: #{tpu_custom_call.1} parent=1 // pred_region
      %55 = dma.done [#allocation8], 2048
    $region33: #{tpu_custom_call.1} parent=1 // pred_fallthru
      _
    %p56 = scmp.eq.s32.totalorder 0, 0
    // Predicated region
    $region34: #{tpu_custom_call.1} parent=1 // pred_check
      %p57 = pneg %p56
    $region35: #{tpu_custom_call.1} parent=1 // pred_check_branch
      %59 = sbr.rel (%p57) target = $region37
    $region36: #{tpu_custom_call.1} parent=1 // pred_region
      %vm60 = vcmask 261120
      %61 = vst.msk [vmem:[#allocation2] sm:$0xff] %vm60, 0.0
      %62 = vst.msk [vmem:[#allocation3] sm:$0xff] %vm60, 0.0
    $region37: #{tpu_custom_call.1} parent=1 // pred_fallthru
      _
    %v63 = vld [vmem:[#allocation4] sm:$0xff]
    %v64 = vld [vmem:[#allocation4 + $0x8] sm:$0xff]
    %v65 = vld [vmem:[#allocation4 + $0x10] sm:$0xff]
    %v66 = vld [vmem:[#allocation4 + $0x18] sm:$0xff]
    %v67 = vld [vmem:[#allocation4 + $0x20] sm:$0xff]
    %v68 = vld [vmem:[#allocation4 + $0x28] sm:$0xff]
    %v69 = vld [vmem:[#allocation4 + $0x30] sm:$0x3]
    %v70 = vld [vmem:[#allocation7] sm:$0xff]
    %v71 = vld [vmem:[#allocation7 + $0x8] sm:$0xff]
    %v72 = vld [vmem:[#allocation7 + $0x10] sm:$0xff]
    %v73 = vld [vmem:[#allocation7 + $0x18] sm:$0xff]
    %v74 = vld [vmem:[#allocation7 + $0x20] sm:$0xff]
    %v75 = vld [vmem:[#allocation7 + $0x28] sm:$0xff]
    %v76 = vld [vmem:[#allocation7 + $0x30] sm:$0xff]
    %v77 = vld [vmem:[#allocation7 + $0x38] sm:$0xff]
    %v78 = vld [vmem:[#allocation7 + $0x40] sm:$0xff]
    %v79 = vld [vmem:[#allocation7 + $0x48] sm:$0xff]
    %v80 = vld [vmem:[#allocation7 + $0x50] sm:$0xff]
    %v81 = vld [vmem:[#allocation7 + $0x58] sm:$0xff]
    %v82 = vld [vmem:[#allocation7 + $0x60] sm:$0xff]
    %v83 = vld [vmem:[#allocation7 + $0x68] sm:$0xff]
    %v84 = vld [vmem:[#allocation7 + $0x70] sm:$0xff]
    %v85 = vld [vmem:[#allocation7 + $0x78] sm:$0xff]
    %v86 = vld [vmem:[%s5] sm:$0x1]
    %v87 = vld [vmem:[#allocation2] sm:$0xff]
    %v88 = vld [vmem:[#allocation3] sm:$0xff]
    %v89 = vld [vmem:[%s0] sm:$0xff]
    %v90 = vld [vmem:[%s1] sm:$0xff]
    %92 = vset.pattern.permute.xlu0 0
    %93 = vperm.xlu0 %92, %v90
    %v94 = vpop.permute.xlu0 %93
    %v96 = vmul.f32 %v94, %v87
    %97 = vset.pattern.permute.xlu0 1
    %98 = vperm.xlu0 %97, %v90
    %v99 = vpop.permute.xlu0 %98
    %v101 = vmul.f32 %v99, %v87
    %102 = vset.pattern.permute.xlu0 2
    %103 = vperm.xlu0 %102, %v90
    %v104 = vpop.permute.xlu0 %103
    %v106 = vmul.f32 %v104, %v87
    %107 = vset.pattern.permute.xlu0 3
    %108 = vperm.xlu0 %107, %v90
    %v109 = vpop.permute.xlu0 %108
    %v111 = vmul.f32 %v109, %v87
    %113 = vrot.lane.b32.xlu0 %v101, 32
    %v114 = vpop.permute.xlu0 %113
    %117 = vrot.lane.b32.xlu0 %v106, 64
    %v118 = vpop.permute.xlu0 %117
    %121 = vrot.lane.b32.xlu0 %v111, 96
    %v122 = vpop.permute.xlu0 %121
    %vm124 = vcmask 261120
    %v125 = vsel %vm124, %v96, %v114
    %vm126 = vcmask 523264
    %v127 = vsel %vm126, %v125, %v118
    %vm128 = vcmask 785408
    %v129 = vsel %vm128, %v127, %v122
    %130 = vmatpush.msra.mxu0 %v85
    %131 = vmatpush.msra.mxu0 %v84
    %132 = vmatpush.msra.mxu0 %v83
    %133 = vmatpush.msra.mxu0 %v82
    %134 = vmatpush.msra.mxu0 %v81
    %135 = vmatpush.msra.mxu0 %v80
    %136 = vmatpush.msra.mxu0 %v79
    %137 = vmatpush.msra.mxu0 %v78
    %138 = vmatpush.msra.mxu0 %v77
    %139 = vmatpush.msra.mxu0 %v76
    %140 = vmatpush.msra.mxu0 %v75
    %141 = vmatpush.msra.mxu0 %v74
    %142 = vmatpush.msra.mxu0 %v73
    %143 = vmatpush.msra.mxu0 %v72
    %144 = vmatpush.msra.mxu0 %v71
    %145 = vmatpush.msra.mxu0 %v70
    %146 = vmatmul.f32.gmra.mxu0 %v129
    %v147 = vpop.f32.mrf.mxu0
    %v148 = vadd.f32 0.0, %v147
    %149 = vdwg.mxu0
    %vm150 = vcmask 408576
    %v152 = vsel %vm150, %v89, 0
    %vm154 = vcmask 1041408
    %v156 = vsel %vm154, %v69, 0
    %158 = vmatpush.msra.mxu0 0.0
    %159 = vmatpush.msra.mxu0 0.0
    %160 = vmatpush.msra.mxu0 0.0
    %161 = vmatpush.msra.mxu0 0.0
    %162 = vmatpush.msra.mxu0 0.0
    %163 = vmatpush.msra.mxu0 0.0
    %164 = vmatpush.msra.mxu0 0.0
    %165 = vmatpush.msra.mxu0 0.0
    %166 = vmatpush.msra.mxu0 0.0
    %167 = vmatpush.msra.mxu0 %v156
    %168 = vmatpush.msra.mxu0 %v68
    %169 = vmatpush.msra.mxu0 %v67
    %170 = vmatpush.msra.mxu0 %v66
    %171 = vmatpush.msra.mxu0 %v65
    %172 = vmatpush.msra.mxu0 %v64
    %173 = vmatpush.msra.mxu0 %v63
    %174 = vmatmul.f32.gmra.mxu0 %v152
    %v175 = vpop.f32.mrf.mxu0
    %v176 = vadd.f32 %v148, %v175
    %177 = vdwg.mxu0
    %v178 = vxor.u32 %v176, 2147483648
    %v179 = vmul.f32 %v178, 1.442695
    %v180 = vpow.pop %v179
    %v181 = vadd.f32 %v180, 1.0
    %v182 = vrcp.pop %v181
    %v183 = vmul.f32 %v181, %v182
    %v184 = vsub.f32 1.0, %v183
    %v185 = vmul.f32 %v182, %v184
    %v186 = vadd.f32 %v182, %v185
    %vm187 = vweird.f32 %v181
    %vm188 = vweird.f32 %v182
    %vm189 = vmor %vm187, %vm188
    %v190 = vsel %vm189, %v182, %v186
    %v191 = vand.u32 2147483647, %v181
    %vm192 = vcmp.eq.f32.partialorder %v191, 8.507059e+37
    %v193 = vand.u32 %v181, 2147483648
    %v194 = vor.u32 1.1754944e-38, %v193
    %v195 = vsel %vm192, %v194, %v190
    %v196 = vmul.f32 1.0, %v195
    %v197 = vtanh.pop %v176
    %199 = vrot.lane.b32.xlu0 %v88, 64
    %v200 = vpop.permute.xlu0 %199
    %v202 = vmul.f32 %v196, %v200
    %204 = vrot.lane.b32.xlu0 %v197, 96
    %v205 = vpop.permute.xlu0 %204
    %v207 = vmul.f32 %v196, %v205
    %209 = vrot.lane.b32.xlu0 %v207, 64
    %v210 = vpop.permute.xlu0 %209
    %v212 = vadd.f32 %v202, %v210
    %v213 = vtanh.pop %v212
    %215 = vrot.lane.b32.xlu0 %v213, 32
    %v216 = vpop.permute.xlu0 %215
    %v218 = vmul.f32 %v196, %v216
    %v220 = vperm.slane %v86, 0
    %221 = vrot.lane.b32.xlu0 %v220, 96
    %v222 = vpop.permute.xlu0 %221
    %v224 = vmul.f32 %v218, %v222
    %226 = vrot.lane.b32.xlu0 %v224, 32
    %v227 = vpop.permute.xlu0 %226
    %v229 = vsel %vm124, %v227, 0.0
    %230 = vadd.xlane.f32.xlu0 %v229
    %v231 = vpop.xlane.xlu0 %230
    %s232 = scalar_lea.vmem %s0, 8
    %v233 = vld [vmem:[%s232] sm:$0xff]
    %s234 = scalar_lea.vmem %s1, 8
    %v235 = vld [vmem:[%s234] sm:$0xff]
    %237 = vset.pattern.permute.xlu0 0
    %238 = vperm.xlu0 %237, %v235
    %v239 = vpop.permute.xlu0 %238
    %v241 = vmul.f32 %v239, %v218
    %242 = vset.pattern.permute.xlu0 1
    %243 = vperm.xlu0 %242, %v235
    %v244 = vpop.permute.xlu0 %243
    %v246 = vmul.f32 %v244, %v218
    %247 = vset.pattern.permute.xlu0 2
    %248 = vperm.xlu0 %247, %v235
    %v249 = vpop.permute.xlu0 %248
    %v251 = vmul.f32 %v249, %v218
    %252 = vset.pattern.permute.xlu0 3
    %253 = vperm.xlu0 %252, %v235
    %v254 = vpop.permute.xlu0 %253
    %v256 = vmul.f32 %v254, %v218
    %258 = vrot.lane.b32.xlu0 %v241, 32
    %v259 = vpop.permute.xlu0 %258
    %262 = vrot.lane.b32.xlu0 %v246, 64
    %v263 = vpop.permute.xlu0 %262
    %266 = vrot.lane.b32.xlu0 %v251, 96
    %v267 = vpop.permute.xlu0 %266
    %v269 = vsel %vm124, %v259, %v263
    %v270 = vsel %vm126, %v269, %v267
    %v271 = vsel %vm128, %v270, %v256
    %272 = vmatpush.msra.mxu0 %v85
    %273 = vmatpush.msra.mxu0 %v84
    %274 = vmatpush.msra.mxu0 %v83
    %275 = vmatpush.msra.mxu0 %v82
    %276 = vmatpush.msra.mxu0 %v81
    %277 = vmatpush.msra.mxu0 %v80
    %278 = vmatpush.msra.mxu0 %v79
    %279 = vmatpush.msra.mxu0 %v78
    %280 = vmatpush.msra.mxu0 %v77
    %281 = vmatpush.msra.mxu0 %v76
    %282 = vmatpush.msra.mxu0 %v75
    %283 = vmatpush.msra.mxu0 %v74
    %284 = vmatpush.msra.mxu0 %v73
    %285 = vmatpush.msra.mxu0 %v72
    %286 = vmatpush.msra.mxu0 %v71
    %287 = vmatpush.msra.mxu0 %v70
    %288 = vmatmul.f32.gmra.mxu0 %v271
    %v289 = vpop.f32.mrf.mxu0
    %v290 = vadd.f32 0.0, %v289
    %291 = vdwg.mxu0
    %v293 = vsel %vm150, %v233, 0
    %295 = vmatpush.msra.mxu0 0.0
    %296 = vmatpush.msra.mxu0 0.0
    %297 = vmatpush.msra.mxu0 0.0
    %298 = vmatpush.msra.mxu0 0.0
    %299 = vmatpush.msra.mxu0 0.0
    %300 = vmatpush.msra.mxu0 0.0
    %301 = vmatpush.msra.mxu0 0.0
    %302 = vmatpush.msra.mxu0 0.0
    %303 = vmatpush.msra.mxu0 0.0
    %304 = vmatpush.msra.mxu0 %v156
    %305 = vmatpush.msra.mxu0 %v68
    %306 = vmatpush.msra.mxu0 %v67
    %307 = vmatpush.msra.mxu0 %v66
    %308 = vmatpush.msra.mxu0 %v65
    %309 = vmatpush.msra.mxu0 %v64
    %310 = vmatpush.msra.mxu0 %v63
    %311 = vmatmul.f32.gmra.mxu0 %v293
    %v312 = vpop.f32.mrf.mxu0
    %v313 = vadd.f32 %v290, %v312
    %314 = vdwg.mxu0
    %v315 = vxor.u32 %v313, 2147483648
    %v316 = vmul.f32 %v315, 1.442695
    %v317 = vpow.pop %v316
    %v318 = vadd.f32 %v317, 1.0
    %v319 = vrcp.pop %v318
    %v320 = vmul.f32 %v318, %v319
    %v321 = vsub.f32 1.0, %v320
    %v322 = vmul.f32 %v319, %v321
    %v323 = vadd.f32 %v319, %v322
    %vm324 = vweird.f32 %v318
    %vm325 = vweird.f32 %v319
    %vm326 = vmor %vm324, %vm325
    %v327 = vsel %vm326, %v319, %v323
    %v328 = vand.u32 2147483647, %v318
    %vm329 = vcmp.eq.f32.partialorder %v328, 8.507059e+37
    %v330 = vand.u32 %v318, 2147483648
    %v331 = vor.u32 1.1754944e-38, %v330
    %v332 = vsel %vm329, %v331, %v327
    %v333 = vmul.f32 1.0, %v332
    %v334 = vtanh.pop %v313
    %v335 = vmul.f32 %v333, %v212
    %337 = vrot.lane.b32.xlu0 %v334, 96
    %v338 = vpop.permute.xlu0 %337
    %v340 = vmul.f32 %v333, %v338
    %342 = vrot.lane.b32.xlu0 %v340, 64
    %v343 = vpop.permute.xlu0 %342
    %v345 = vadd.f32 %v335, %v343
    %v346 = vtanh.pop %v345
    %348 = vrot.lane.b32.xlu0 %v346, 32
    %v349 = vpop.permute.xlu0 %348
    %v351 = vmul.f32 %v333, %v349
    %v352 = vmul.f32 %v351, %v222
    %354 = vrot.lane.b32.xlu0 %v352, 32
    %v355 = vpop.permute.xlu0 %354
    %v357 = vsel %vm124, %v355, 0.0
    %358 = vadd.xlane.f32.xlu0 %v357
    %v359 = vpop.xlane.xlu0 %358
    %s360 = scalar_lea.vmem %s0, 16
    %v361 = vld [vmem:[%s360] sm:$0xff]
    %s362 = scalar_lea.vmem %s1, 16
    %v363 = vld [vmem:[%s362] sm:$0xff]
    %365 = vset.pattern.permute.xlu0 0
    %366 = vperm.xlu0 %365, %v363
    %v367 = vpop.permute.xlu0 %366
    %v369 = vmul.f32 %v367, %v351
    %370 = vset.pattern.permute.xlu0 1
    %371 = vperm.xlu0 %370, %v363
    %v372 = vpop.permute.xlu0 %371
    %v374 = vmul.f32 %v372, %v351
    %375 = vset.pattern.permute.xlu0 2
    %376 = vperm.xlu0 %375, %v363
    %v377 = vpop.permute.xlu0 %376
    %v379 = vmul.f32 %v377, %v351
    %380 = vset.pattern.permute.xlu0 3
    %381 = vperm.xlu0 %380, %v363
    %v382 = vpop.permute.xlu0 %381
    %v384 = vmul.f32 %v382, %v351
    %386 = vrot.lane.b32.xlu0 %v369, 32
    %v387 = vpop.permute.xlu0 %386
    %390 = vrot.lane.b32.xlu0 %v374, 64
    %v391 = vpop.permute.xlu0 %390
    %394 = vrot.lane.b32.xlu0 %v379, 96
    %v395 = vpop.permute.xlu0 %394
    %v397 = vsel %vm124, %v387, %v391
    %v398 = vsel %vm126, %v397, %v395
    %v399 = vsel %vm128, %v398, %v384
    %400 = vmatpush.msra.mxu0 %v85
    %401 = vmatpush.msra.mxu0 %v84
    %402 = vmatpush.msra.mxu0 %v83
    %403 = vmatpush.msra.mxu0 %v82
    %404 = vmatpush.msra.mxu0 %v81
    %405 = vmatpush.msra.mxu0 %v80
    %406 = vmatpush.msra.mxu0 %v79
    %407 = vmatpush.msra.mxu0 %v78
    %408 = vmatpush.msra.mxu0 %v77
    %409 = vmatpush.msra.mxu0 %v76
    %410 = vmatpush.msra.mxu0 %v75
    %411 = vmatpush.msra.mxu0 %v74
    %412 = vmatpush.msra.mxu0 %v73
    %413 = vmatpush.msra.mxu0 %v72
    %414 = vmatpush.msra.mxu0 %v71
    %415 = vmatpush.msra.mxu0 %v70
    %416 = vmatmul.f32.gmra.mxu0 %v399
    %v417 = vpop.f32.mrf.mxu0
    %v418 = vadd.f32 0.0, %v417
    %419 = vdwg.mxu0
    %v421 = vsel %vm150, %v361, 0
    %423 = vmatpush.msra.mxu0 0.0
    %424 = vmatpush.msra.mxu0 0.0
    %425 = vmatpush.msra.mxu0 0.0
    %426 = vmatpush.msra.mxu0 0.0
    %427 = vmatpush.msra.mxu0 0.0
    %428 = vmatpush.msra.mxu0 0.0
    %429 = vmatpush.msra.mxu0 0.0
    %430 = vmatpush.msra.mxu0 0.0
    %431 = vmatpush.msra.mxu0 0.0
    %432 = vmatpush.msra.mxu0 %v156
    %433 = vmatpush.msra.mxu0 %v68
    %434 = vmatpush.msra.mxu0 %v67
    %435 = vmatpush.msra.mxu0 %v66
    %436 = vmatpush.msra.mxu0 %v65
    %437 = vmatpush.msra.mxu0 %v64
    %438 = vmatpush.msra.mxu0 %v63
    %439 = vmatmul.f32.gmra.mxu0 %v421
    %v440 = vpop.f32.mrf.mxu0
    %v441 = vadd.f32 %v418, %v440
    %442 = vdwg.mxu0
    %v443 = vxor.u32 %v441, 2147483648
    %v444 = vmul.f32 %v443, 1.442695
    %v445 = vpow.pop %v444
    %v446 = vadd.f32 %v445, 1.0
    %v447 = vrcp.pop %v446
    %v448 = vmul.f32 %v446, %v447
    %v449 = vsub.f32 1.0, %v448
    %v450 = vmul.f32 %v447, %v449
    %v451 = vadd.f32 %v447, %v450
    %vm452 = vweird.f32 %v446
    %vm453 = vweird.f32 %v447
    %vm454 = vmor %vm452, %vm453
    %v455 = vsel %vm454, %v447, %v451
    %v456 = vand.u32 2147483647, %v446
    %vm457 = vcmp.eq.f32.partialorder %v456, 8.507059e+37
    %v458 = vand.u32 %v446, 2147483648
    %v459 = vor.u32 1.1754944e-38, %v458
    %v460 = vsel %vm457, %v459, %v455
    %v461 = vmul.f32 1.0, %v460
    %v462 = vtanh.pop %v441
    %v463 = vmul.f32 %v461, %v345
    %465 = vrot.lane.b32.xlu0 %v462, 96
    %v466 = vpop.permute.xlu0 %465
    %v468 = vmul.f32 %v461, %v466
    %470 = vrot.lane.b32.xlu0 %v468, 64
    %v471 = vpop.permute.xlu0 %470
    %v473 = vadd.f32 %v463, %v471
    %v474 = vtanh.pop %v473
    %476 = vrot.lane.b32.xlu0 %v474, 32
    %v477 = vpop.permute.xlu0 %476
    %v479 = vmul.f32 %v461, %v477
    %v480 = vmul.f32 %v479, %v222
    %482 = vrot.lane.b32.xlu0 %v480, 32
    %v483 = vpop.permute.xlu0 %482
    %v485 = vsel %vm124, %v483, 0.0
    %486 = vadd.xlane.f32.xlu0 %v485
    %v487 = vpop.xlane.xlu0 %486
    %s488 = scalar_lea.vmem %s0, 24
    %v489 = vld [vmem:[%s488] sm:$0xff]
    %s490 = scalar_lea.vmem %s1, 24
    %v491 = vld [vmem:[%s490] sm:$0xff]
    %493 = vset.pattern.permute.xlu0 0
    %494 = vperm.xlu0 %493, %v491
    %v495 = vpop.permute.xlu0 %494
    %v497 = vmul.f32 %v495, %v479
    %498 = vset.pattern.permute.xlu0 1
    %499 = vperm.xlu0 %498, %v491
    %v500 = vpop.permute.xlu0 %499
    %v502 = vmul.f32 %v500, %v479
    %503 = vset.pattern.permute.xlu0 2
    %504 = vperm.xlu0 %503, %v491
    %v505 = vpop.permute.xlu0 %504
    %v507 = vmul.f32 %v505, %v479
    %508 = vset.pattern.permute.xlu0 3
    %509 = vperm.xlu0 %508, %v491
    %v510 = vpop.permute.xlu0 %509
    %v512 = vmul.f32 %v510, %v479
    %514 = vrot.lane.b32.xlu0 %v497, 32
    %v515 = vpop.permute.xlu0 %514
    %518 = vrot.lane.b32.xlu0 %v502, 64
    %v519 = vpop.permute.xlu0 %518
    %522 = vrot.lane.b32.xlu0 %v507, 96
    %v523 = vpop.permute.xlu0 %522
    %v525 = vsel %vm124, %v515, %v519
    %v526 = vsel %vm126, %v525, %v523
    %v527 = vsel %vm128, %v526, %v512
    %528 = vmatpush.msra.mxu0 %v85
    %529 = vmatpush.msra.mxu0 %v84
    %530 = vmatpush.msra.mxu0 %v83
    %531 = vmatpush.msra.mxu0 %v82
    %532 = vmatpush.msra.mxu0 %v81
    %533 = vmatpush.msra.mxu0 %v80
    %534 = vmatpush.msra.mxu0 %v79
    %535 = vmatpush.msra.mxu0 %v78
    %536 = vmatpush.msra.mxu0 %v77
    %537 = vmatpush.msra.mxu0 %v76
    %538 = vmatpush.msra.mxu0 %v75
    %539 = vmatpush.msra.mxu0 %v74
    %540 = vmatpush.msra.mxu0 %v73
    %541 = vmatpush.msra.mxu0 %v72
    %542 = vmatpush.msra.mxu0 %v71
    %543 = vmatpush.msra.mxu0 %v70
    %544 = vmatmul.f32.gmra.mxu0 %v527
    %v545 = vpop.f32.mrf.mxu0
    %v546 = vadd.f32 0.0, %v545
    %547 = vdwg.mxu0
    %v549 = vsel %vm150, %v489, 0
    %551 = vmatpush.msra.mxu0 0.0
    %552 = vmatpush.msra.mxu0 0.0
    %553 = vmatpush.msra.mxu0 0.0
    %554 = vmatpush.msra.mxu0 0.0
    %555 = vmatpush.msra.mxu0 0.0
    %556 = vmatpush.msra.mxu0 0.0
    %557 = vmatpush.msra.mxu0 0.0
    %558 = vmatpush.msra.mxu0 0.0
    %559 = vmatpush.msra.mxu0 0.0
    %560 = vmatpush.msra.mxu0 %v156
    %561 = vmatpush.msra.mxu0 %v68
    %562 = vmatpush.msra.mxu0 %v67
    %563 = vmatpush.msra.mxu0 %v66
    %564 = vmatpush.msra.mxu0 %v65
    %565 = vmatpush.msra.mxu0 %v64
    %566 = vmatpush.msra.mxu0 %v63
    %567 = vmatmul.f32.gmra.mxu0 %v549
    %v568 = vpop.f32.mrf.mxu0
    %v569 = vadd.f32 %v546, %v568
    %570 = vdwg.mxu0
    %v571 = vxor.u32 %v569, 2147483648
    %v572 = vmul.f32 %v571, 1.442695
    %v573 = vpow.pop %v572
    %v574 = vadd.f32 %v573, 1.0
    %v575 = vrcp.pop %v574
    %v576 = vmul.f32 %v574, %v575
    %v577 = vsub.f32 1.0, %v576
    %v578 = vmul.f32 %v575, %v577
    %v579 = vadd.f32 %v575, %v578
    %vm580 = vweird.f32 %v574
    %vm581 = vweird.f32 %v575
    %vm582 = vmor %vm580, %vm581
    %v583 = vsel %vm582, %v575, %v579
    %v584 = vand.u32 2147483647, %v574
    %vm585 = vcmp.eq.f32.partialorder %v584, 8.507059e+37
    %v586 = vand.u32 %v574, 2147483648
    %v587 = vor.u32 1.1754944e-38, %v586
    %v588 = vsel %vm585, %v587, %v583
    %v589 = vmul.f32 1.0, %v588
    %v590 = vtanh.pop %v569
    %v591 = vmul.f32 %v589, %v473
    %593 = vrot.lane.b32.xlu0 %v590, 96
    %v594 = vpop.permute.xlu0 %593
    %v596 = vmul.f32 %v589, %v594
    %598 = vrot.lane.b32.xlu0 %v596, 64
    %v599 = vpop.permute.xlu0 %598
    %v601 = vadd.f32 %v591, %v599
    %v602 = vtanh.pop %v601
    %604 = vrot.lane.b32.xlu0 %v602, 32
    %v605 = vpop.permute.xlu0 %604
    %v607 = vmul.f32 %v589, %v605
    %v608 = vmul.f32 %v607, %v222
    %610 = vrot.lane.b32.xlu0 %v608, 32
    %v611 = vpop.permute.xlu0 %610
    %v613 = vsel %vm124, %v611, 0.0
    %614 = vadd.xlane.f32.xlu0 %v613
    %v615 = vpop.xlane.xlu0 %614
    %s616 = scalar_lea.vmem %s0, 32
    %v617 = vld [vmem:[%s616] sm:$0xff]
    %s618 = scalar_lea.vmem %s1, 32
    %v619 = vld [vmem:[%s618] sm:$0xff]
    %621 = vset.pattern.permute.xlu0 0
    %622 = vperm.xlu0 %621, %v619
    %v623 = vpop.permute.xlu0 %622
    %v625 = vmul.f32 %v623, %v607
    %626 = vset.pattern.permute.xlu0 1
    %627 = vperm.xlu0 %626, %v619
    %v628 = vpop.permute.xlu0 %627
    %v630 = vmul.f32 %v628, %v607
    %631 = vset.pattern.permute.xlu0 2
    %632 = vperm.xlu0 %631, %v619
    %v633 = vpop.permute.xlu0 %632
    %v635 = vmul.f32 %v633, %v607
    %636 = vset.pattern.permute.xlu0 3
    %637 = vperm.xlu0 %636, %v619
    %v638 = vpop.permute.xlu0 %637
    %v640 = vmul.f32 %v638, %v607
    %642 = vrot.lane.b32.xlu0 %v625, 32
    %v643 = vpop.permute.xlu0 %642
    %646 = vrot.lane.b32.xlu0 %v630, 64
    %v647 = vpop.permute.xlu0 %646
    %650 = vrot.lane.b32.xlu0 %v635, 96
    %v651 = vpop.permute.xlu0 %650
    %v653 = vsel %vm124, %v643, %v647
    %v654 = vsel %vm126, %v653, %v651
    %v655 = vsel %vm128, %v654, %v640
    %656 = vmatpush.msra.mxu0 %v85
    %657 = vmatpush.msra.mxu0 %v84
    %658 = vmatpush.msra.mxu0 %v83
    %659 = vmatpush.msra.mxu0 %v82
    %660 = vmatpush.msra.mxu0 %v81
    %661 = vmatpush.msra.mxu0 %v80
    %662 = vmatpush.msra.mxu0 %v79
    %663 = vmatpush.msra.mxu0 %v78
    %664 = vmatpush.msra.mxu0 %v77
    %665 = vmatpush.msra.mxu0 %v76
    %666 = vmatpush.msra.mxu0 %v75
    %667 = vmatpush.msra.mxu0 %v74
    %668 = vmatpush.msra.mxu0 %v73
    %669 = vmatpush.msra.mxu0 %v72
    %670 = vmatpush.msra.mxu0 %v71
    %671 = vmatpush.msra.mxu0 %v70
    %672 = vmatmul.f32.gmra.mxu0 %v655
    %v673 = vpop.f32.mrf.mxu0
    %v674 = vadd.f32 0.0, %v673
    %675 = vdwg.mxu0
    %v677 = vsel %vm150, %v617, 0
    %679 = vmatpush.msra.mxu0 0.0
    %680 = vmatpush.msra.mxu0 0.0
    %681 = vmatpush.msra.mxu0 0.0
    %682 = vmatpush.msra.mxu0 0.0
    %683 = vmatpush.msra.mxu0 0.0
    %684 = vmatpush.msra.mxu0 0.0
    %685 = vmatpush.msra.mxu0 0.0
    %686 = vmatpush.msra.mxu0 0.0
    %687 = vmatpush.msra.mxu0 0.0
    %688 = vmatpush.msra.mxu0 %v156
    %689 = vmatpush.msra.mxu0 %v68
    %690 = vmatpush.msra.mxu0 %v67
    %691 = vmatpush.msra.mxu0 %v66
    %692 = vmatpush.msra.mxu0 %v65
    %693 = vmatpush.msra.mxu0 %v64
    %694 = vmatpush.msra.mxu0 %v63
    %695 = vmatmul.f32.gmra.mxu0 %v677
    %v696 = vpop.f32.mrf.mxu0
    %v697 = vadd.f32 %v674, %v696
    %698 = vdwg.mxu0
    %v699 = vxor.u32 %v697, 2147483648
    %v700 = vmul.f32 %v699, 1.442695
    %v701 = vpow.pop %v700
    %v702 = vadd.f32 %v701, 1.0
    %v703 = vrcp.pop %v702
    %v704 = vmul.f32 %v702, %v703
    %v705 = vsub.f32 1.0, %v704
    %v706 = vmul.f32 %v703, %v705
    %v707 = vadd.f32 %v703, %v706
    %vm708 = vweird.f32 %v702
    %vm709 = vweird.f32 %v703
    %vm710 = vmor %vm708, %vm709
    %v711 = vsel %vm710, %v703, %v707
    %v712 = vand.u32 2147483647, %v702
    %vm713 = vcmp.eq.f32.partialorder %v712, 8.507059e+37
    %v714 = vand.u32 %v702, 2147483648
    %v715 = vor.u32 1.1754944e-38, %v714
    %v716 = vsel %vm713, %v715, %v711
    %v717 = vmul.f32 1.0, %v716
    %v718 = vtanh.pop %v697
    %v719 = vmul.f32 %v717, %v601
    %721 = vrot.lane.b32.xlu0 %v718, 96
    %v722 = vpop.permute.xlu0 %721
    %v724 = vmul.f32 %v717, %v722
    %726 = vrot.lane.b32.xlu0 %v724, 64
    %v727 = vpop.permute.xlu0 %726
    %v729 = vadd.f32 %v719, %v727
    %v730 = vtanh.pop %v729
    %732 = vrot.lane.b32.xlu0 %v730, 32
    %v733 = vpop.permute.xlu0 %732
    %v735 = vmul.f32 %v717, %v733
    %v736 = vmul.f32 %v735, %v222
    %738 = vrot.lane.b32.xlu0 %v736, 32
    %v739 = vpop.permute.xlu0 %738
    %v741 = vsel %vm124, %v739, 0.0
    %742 = vadd.xlane.f32.xlu0 %v741
    %v743 = vpop.xlane.xlu0 %742
    %s744 = scalar_lea.vmem %s0, 40
    %v745 = vld [vmem:[%s744] sm:$0xff]
    %s746 = scalar_lea.vmem %s1, 40
    %v747 = vld [vmem:[%s746] sm:$0xff]
    %749 = vset.pattern.permute.xlu0 0
    %750 = vperm.xlu0 %749, %v747
    %v751 = vpop.permute.xlu0 %750
    %v753 = vmul.f32 %v751, %v735
    %754 = vset.pattern.permute.xlu0 1
    %755 = vperm.xlu0 %754, %v747
    %v756 = vpop.permute.xlu0 %755
    %v758 = vmul.f32 %v756, %v735
    %759 = vset.pattern.permute.xlu0 2
    %760 = vperm.xlu0 %759, %v747
    %v761 = vpop.permute.xlu0 %760
    %v763 = vmul.f32 %v761, %v735
    %764 = vset.pattern.permute.xlu0 3
    %765 = vperm.xlu0 %764, %v747
    %v766 = vpop.permute.xlu0 %765
    %v768 = vmul.f32 %v766, %v735
    %770 = vrot.lane.b32.xlu0 %v753, 32
    %v771 = vpop.permute.xlu0 %770
    %774 = vrot.lane.b32.xlu0 %v758, 64
    %v775 = vpop.permute.xlu0 %774
    %778 = vrot.lane.b32.xlu0 %v763, 96
    %v779 = vpop.permute.xlu0 %778
    %v781 = vsel %vm124, %v771, %v775
    %v782 = vsel %vm126, %v781, %v779
    %v783 = vsel %vm128, %v782, %v768
    %784 = vmatpush.msra.mxu0 %v85
    %785 = vmatpush.msra.mxu0 %v84
    %786 = vmatpush.msra.mxu0 %v83
    %787 = vmatpush.msra.mxu0 %v82
    %788 = vmatpush.msra.mxu0 %v81
    %789 = vmatpush.msra.mxu0 %v80
    %790 = vmatpush.msra.mxu0 %v79
    %791 = vmatpush.msra.mxu0 %v78
    %792 = vmatpush.msra.mxu0 %v77
    %793 = vmatpush.msra.mxu0 %v76
    %794 = vmatpush.msra.mxu0 %v75
    %795 = vmatpush.msra.mxu0 %v74
    %796 = vmatpush.msra.mxu0 %v73
    %797 = vmatpush.msra.mxu0 %v72
    %798 = vmatpush.msra.mxu0 %v71
    %799 = vmatpush.msra.mxu0 %v70
    %800 = vmatmul.f32.gmra.mxu0 %v783
    %v801 = vpop.f32.mrf.mxu0
    %v802 = vadd.f32 0.0, %v801
    %803 = vdwg.mxu0
    %v805 = vsel %vm150, %v745, 0
    %807 = vmatpush.msra.mxu0 0.0
    %808 = vmatpush.msra.mxu0 0.0
    %809 = vmatpush.msra.mxu0 0.0
    %810 = vmatpush.msra.mxu0 0.0
    %811 = vmatpush.msra.mxu0 0.0
    %812 = vmatpush.msra.mxu0 0.0
    %813 = vmatpush.msra.mxu0 0.0
    %814 = vmatpush.msra.mxu0 0.0
    %815 = vmatpush.msra.mxu0 0.0
    %816 = vmatpush.msra.mxu0 %v156
    %817 = vmatpush.msra.mxu0 %v68
    %818 = vmatpush.msra.mxu0 %v67
    %819 = vmatpush.msra.mxu0 %v66
    %820 = vmatpush.msra.mxu0 %v65
    %821 = vmatpush.msra.mxu0 %v64
    %822 = vmatpush.msra.mxu0 %v63
    %823 = vmatmul.f32.gmra.mxu0 %v805
    %v824 = vpop.f32.mrf.mxu0
    %v825 = vadd.f32 %v802, %v824
    %826 = vdwg.mxu0
    %v827 = vxor.u32 %v825, 2147483648
    %v828 = vmul.f32 %v827, 1.442695
    %v829 = vpow.pop %v828
    %v830 = vadd.f32 %v829, 1.0
    %v831 = vrcp.pop %v830
    %v832 = vmul.f32 %v830, %v831
    %v833 = vsub.f32 1.0, %v832
    %v834 = vmul.f32 %v831, %v833
    %v835 = vadd.f32 %v831, %v834
    %vm836 = vweird.f32 %v830
    %vm837 = vweird.f32 %v831
    %vm838 = vmor %vm836, %vm837
    %v839 = vsel %vm838, %v831, %v835
    %v840 = vand.u32 2147483647, %v830
    %vm841 = vcmp.eq.f32.partialorder %v840, 8.507059e+37
    %v842 = vand.u32 %v830, 2147483648
    %v843 = vor.u32 1.1754944e-38, %v842
    %v844 = vsel %vm841, %v843, %v839
    %v845 = vmul.f32 1.0, %v844
    %v846 = vtanh.pop %v825
    %v847 = vmul.f32 %v845, %v729
    %849 = vrot.lane.b32.xlu0 %v846, 96
    %v850 = vpop.permute.xlu0 %849
    %v852 = vmul.f32 %v845, %v850
    %854 = vrot.lane.b32.xlu0 %v852, 64
    %v855 = vpop.permute.xlu0 %854
    %v857 = vadd.f32 %v847, %v855
    %v858 = vtanh.pop %v857
    %860 = vrot.lane.b32.xlu0 %v858, 32
    %v861 = vpop.permute.xlu0 %860
    %v863 = vmul.f32 %v845, %v861
    %v864 = vmul.f32 %v863, %v222
    %866 = vrot.lane.b32.xlu0 %v864, 32
    %v867 = vpop.permute.xlu0 %866
    %v869 = vsel %vm124, %v867, 0.0
    %870 = vadd.xlane.f32.xlu0 %v869
    %v871 = vpop.xlane.xlu0 %870
    %s872 = scalar_lea.vmem %s0, 48
    %v873 = vld [vmem:[%s872] sm:$0xff]
    %s874 = scalar_lea.vmem %s1, 48
    %v875 = vld [vmem:[%s874] sm:$0xff]
    %877 = vset.pattern.permute.xlu0 0
    %878 = vperm.xlu0 %877, %v875
    %v879 = vpop.permute.xlu0 %878
    %v881 = vmul.f32 %v879, %v863
    %882 = vset.pattern.permute.xlu0 1
    %883 = vperm.xlu0 %882, %v875
    %v884 = vpop.permute.xlu0 %883
    %v886 = vmul.f32 %v884, %v863
    %887 = vset.pattern.permute.xlu0 2
    %888 = vperm.xlu0 %887, %v875
    %v889 = vpop.permute.xlu0 %888
    %v891 = vmul.f32 %v889, %v863
    %892 = vset.pattern.permute.xlu0 3
    %893 = vperm.xlu0 %892, %v875
    %v894 = vpop.permute.xlu0 %893
    %v896 = vmul.f32 %v894, %v863
    %898 = vrot.lane.b32.xlu0 %v881, 32
    %v899 = vpop.permute.xlu0 %898
    %902 = vrot.lane.b32.xlu0 %v886, 64
    %v903 = vpop.permute.xlu0 %902
    %906 = vrot.lane.b32.xlu0 %v891, 96
    %v907 = vpop.permute.xlu0 %906
    %v909 = vsel %vm124, %v899, %v903
    %v910 = vsel %vm126, %v909, %v907
    %v911 = vsel %vm128, %v910, %v896
    %912 = vmatpush.msra.mxu0 %v85
    %913 = vmatpush.msra.mxu0 %v84
    %914 = vmatpush.msra.mxu0 %v83
    %915 = vmatpush.msra.mxu0 %v82
    %916 = vmatpush.msra.mxu0 %v81
    %917 = vmatpush.msra.mxu0 %v80
    %918 = vmatpush.msra.mxu0 %v79
    %919 = vmatpush.msra.mxu0 %v78
    %920 = vmatpush.msra.mxu0 %v77
    %921 = vmatpush.msra.mxu0 %v76
    %922 = vmatpush.msra.mxu0 %v75
    %923 = vmatpush.msra.mxu0 %v74
    %924 = vmatpush.msra.mxu0 %v73
    %925 = vmatpush.msra.mxu0 %v72
    %926 = vmatpush.msra.mxu0 %v71
    %927 = vmatpush.msra.mxu0 %v70
    %928 = vmatmul.f32.gmra.mxu0 %v911
    %v929 = vpop.f32.mrf.mxu0
    %v930 = vadd.f32 0.0, %v929
    %931 = vdwg.mxu0
    %v933 = vsel %vm150, %v873, 0
    %935 = vmatpush.msra.mxu0 0.0
    %936 = vmatpush.msra.mxu0 0.0
    %937 = vmatpush.msra.mxu0 0.0
    %938 = vmatpush.msra.mxu0 0.0
    %939 = vmatpush.msra.mxu0 0.0
    %940 = vmatpush.msra.mxu0 0.0
    %941 = vmatpush.msra.mxu0 0.0
    %942 = vmatpush.msra.mxu0 0.0
    %943 = vmatpush.msra.mxu0 0.0
    %944 = vmatpush.msra.mxu0 %v156
    %945 = vmatpush.msra.mxu0 %v68
    %946 = vmatpush.msra.mxu0 %v67
    %947 = vmatpush.msra.mxu0 %v66
    %948 = vmatpush.msra.mxu0 %v65
    %949 = vmatpush.msra.mxu0 %v64
    %950 = vmatpush.msra.mxu0 %v63
    %951 = vmatmul.f32.gmra.mxu0 %v933
    %v952 = vpop.f32.mrf.mxu0
    %v953 = vadd.f32 %v930, %v952
    %954 = vdwg.mxu0
    %v955 = vxor.u32 %v953, 2147483648
    %v956 = vmul.f32 %v955, 1.442695
    %v957 = vpow.pop %v956
    %v958 = vadd.f32 %v957, 1.0
    %v959 = vrcp.pop %v958
    %v960 = vmul.f32 %v958, %v959
    %v961 = vsub.f32 1.0, %v960
    %v962 = vmul.f32 %v959, %v961
    %v963 = vadd.f32 %v959, %v962
    %vm964 = vweird.f32 %v958
    %vm965 = vweird.f32 %v959
    %vm966 = vmor %vm964, %vm965
    %v967 = vsel %vm966, %v959, %v963
    %v968 = vand.u32 2147483647, %v958
    %vm969 = vcmp.eq.f32.partialorder %v968, 8.507059e+37
    %v970 = vand.u32 %v958, 2147483648
    %v971 = vor.u32 1.1754944e-38, %v970
    %v972 = vsel %vm969, %v971, %v967
    %v973 = vmul.f32 1.0, %v972
    %v974 = vtanh.pop %v953
    %v975 = vmul.f32 %v973, %v857
    %977 = vrot.lane.b32.xlu0 %v974, 96
    %v978 = vpop.permute.xlu0 %977
    %v980 = vmul.f32 %v973, %v978
    %982 = vrot.lane.b32.xlu0 %v980, 64
    %v983 = vpop.permute.xlu0 %982
    %v985 = vadd.f32 %v975, %v983
    %v986 = vtanh.pop %v985
    %988 = vrot.lane.b32.xlu0 %v986, 32
    %v989 = vpop.permute.xlu0 %988
    %v991 = vmul.f32 %v973, %v989
    %v992 = vmul.f32 %v991, %v222
    %994 = vrot.lane.b32.xlu0 %v992, 32
    %v995 = vpop.permute.xlu0 %994
    %v997 = vsel %vm124, %v995, 0.0
    %998 = vadd.xlane.f32.xlu0 %v997
    %v999 = vpop.xlane.xlu0 %998
    %s1000 = scalar_lea.vmem %s0, 56
    %v1001 = vld [vmem:[%s1000] sm:$0xff]
    %s1002 = scalar_lea.vmem %s1, 56
    %v1003 = vld [vmem:[%s1002] sm:$0xff]
    %1005 = vset.pattern.permute.xlu0 0
    %1006 = vperm.xlu0 %1005, %v1003
    %v1007 = vpop.permute.xlu0 %1006
    %v1009 = vmul.f32 %v1007, %v991
    %1010 = vset.pattern.permute.xlu0 1
    %1011 = vperm.xlu0 %1010, %v1003
    %v1012 = vpop.permute.xlu0 %1011
    %v1014 = vmul.f32 %v1012, %v991
    %1015 = vset.pattern.permute.xlu0 2
    %1016 = vperm.xlu0 %1015, %v1003
    %v1017 = vpop.permute.xlu0 %1016
    %v1019 = vmul.f32 %v1017, %v991
    %1020 = vset.pattern.permute.xlu0 3
    %1021 = vperm.xlu0 %1020, %v1003
    %v1022 = vpop.permute.xlu0 %1021
    %v1024 = vmul.f32 %v1022, %v991
    %1026 = vrot.lane.b32.xlu0 %v1009, 32
    %v1027 = vpop.permute.xlu0 %1026
    %1030 = vrot.lane.b32.xlu0 %v1014, 64
    %v1031 = vpop.permute.xlu0 %1030
    %1034 = vrot.lane.b32.xlu0 %v1019, 96
    %v1035 = vpop.permute.xlu0 %1034
    %v1037 = vsel %vm124, %v1027, %v1031
    %v1038 = vsel %vm126, %v1037, %v1035
    %v1039 = vsel %vm128, %v1038, %v1024
    %1040 = vmatpush.msra.mxu0 %v85
    %1041 = vmatpush.msra.mxu0 %v84
    %1042 = vmatpush.msra.mxu0 %v83
    %1043 = vmatpush.msra.mxu0 %v82
    %1044 = vmatpush.msra.mxu0 %v81
    %1045 = vmatpush.msra.mxu0 %v80
    %1046 = vmatpush.msra.mxu0 %v79
    %1047 = vmatpush.msra.mxu0 %v78
    %1048 = vmatpush.msra.mxu0 %v77
    %1049 = vmatpush.msra.mxu0 %v76
    %1050 = vmatpush.msra.mxu0 %v75
    %1051 = vmatpush.msra.mxu0 %v74
    %1052 = vmatpush.msra.mxu0 %v73
    %1053 = vmatpush.msra.mxu0 %v72
    %1054 = vmatpush.msra.mxu0 %v71
    %1055 = vmatpush.msra.mxu0 %v70
    %1056 = vmatmul.f32.gmra.mxu0 %v1039
    %v1057 = vpop.f32.mrf.mxu0
    %v1058 = vadd.f32 0.0, %v1057
    %1059 = vdwg.mxu0
    %v1061 = vsel %vm150, %v1001, 0
    %1063 = vmatpush.msra.mxu0 0.0
    %1064 = vmatpush.msra.mxu0 0.0
    %1065 = vmatpush.msra.mxu0 0.0
    %1066 = vmatpush.msra.mxu0 0.0
    %1067 = vmatpush.msra.mxu0 0.0
    %1068 = vmatpush.msra.mxu0 0.0
    %1069 = vmatpush.msra.mxu0 0.0
    %1070 = vmatpush.msra.mxu0 0.0
    %1071 = vmatpush.msra.mxu0 0.0
    %1072 = vmatpush.msra.mxu0 %v156
    %1073 = vmatpush.msra.mxu0 %v68
    %1074 = vmatpush.msra.mxu0 %v67
    %1075 = vmatpush.msra.mxu0 %v66
    %1076 = vmatpush.msra.mxu0 %v65
    %1077 = vmatpush.msra.mxu0 %v64
    %1078 = vmatpush.msra.mxu0 %v63
    %1079 = vmatmul.f32.gmra.mxu0 %v1061
    %v1080 = vpop.f32.mrf.mxu0
    %v1081 = vadd.f32 %v1058, %v1080
    %1082 = vdwg.mxu0
    %v1083 = vxor.u32 %v1081, 2147483648
    %v1084 = vmul.f32 %v1083, 1.442695
    %v1085 = vpow.pop %v1084
    %v1086 = vadd.f32 %v1085, 1.0
    %v1087 = vrcp.pop %v1086
    %v1088 = vmul.f32 %v1086, %v1087
    %v1089 = vsub.f32 1.0, %v1088
    %v1090 = vmul.f32 %v1087, %v1089
    %v1091 = vadd.f32 %v1087, %v1090
    %vm1092 = vweird.f32 %v1086
    %vm1093 = vweird.f32 %v1087
    %vm1094 = vmor %vm1092, %vm1093
    %v1095 = vsel %vm1094, %v1087, %v1091
    %v1096 = vand.u32 2147483647, %v1086
    %vm1097 = vcmp.eq.f32.partialorder %v1096, 8.507059e+37
    %v1098 = vand.u32 %v1086, 2147483648
    %v1099 = vor.u32 1.1754944e-38, %v1098
    %v1100 = vsel %vm1097, %v1099, %v1095
    %v1101 = vmul.f32 1.0, %v1100
    %v1102 = vtanh.pop %v1081
    %v1103 = vmul.f32 %v1101, %v985
    %1105 = vrot.lane.b32.xlu0 %v1102, 96
    %v1106 = vpop.permute.xlu0 %1105
    %v1108 = vmul.f32 %v1101, %v1106
    %1110 = vrot.lane.b32.xlu0 %v1108, 64
    %v1111 = vpop.permute.xlu0 %1110
    %v1113 = vadd.f32 %v1103, %v1111
    %v1114 = vtanh.pop %v1113
    %1116 = vrot.lane.b32.xlu0 %v1114, 32
    %v1117 = vpop.permute.xlu0 %1116
    %v1119 = vmul.f32 %v1101, %v1117
    %v1120 = vmul.f32 %v1119, %v222
    %1122 = vrot.lane.b32.xlu0 %v1120, 32
    %v1123 = vpop.permute.xlu0 %1122
    %v1125 = vsel %vm124, %v1123, 0.0
    %1126 = vadd.xlane.f32.xlu0 %v1125
    %v1127 = vpop.xlane.xlu0 %1126
    %1129 = vrot.lane.b32.xlu0 %v1119, 32
    %v1130 = vpop.permute.xlu0 %1129
    %1132 = vst.msk [vmem:[#allocation2] sm:$0xff] %vm124, %v1130
    %1134 = vrot.lane.b32.xlu0 %v1113, 64
    %v1135 = vpop.permute.xlu0 %1134
    %1137 = vst.msk [vmem:[#allocation3] sm:$0xff] %vm124, %v1135
    %vm1138 = vcmask 7168
    %v1139 = vsel %vm1138, %v231, %v359
    %vm1140 = vcmask 15360
    %v1141 = vsel %vm1140, %v1139, %v487
    %vm1142 = vcmask 23552
    %v1143 = vsel %vm1142, %v1141, %v615
    %vm1144 = vcmask 31744
    %v1145 = vsel %vm1144, %v1143, %v743
    %vm1146 = vcmask 39936
    %v1147 = vsel %vm1146, %v1145, %v871
    %vm1148 = vcmask 48128
    %v1149 = vsel %vm1148, %v1147, %v999
    %vm1150 = vcmask 56320
    %v1151 = vsel %vm1150, %v1149, %v1127
    %v1152 = vld [vmem:[%s2] sm:$0xff]
    %v1153 = vadd.f32 %v1151, %v1152
    %v1154 = vxor.u32 %v1153, 2147483648
    %v1155 = vmul.f32 %v1154, 1.442695
    %v1156 = vpow.pop %v1155
    %v1157 = vadd.f32 %v1156, 1.0
    %v1158 = vrcp.pop %v1157
    %v1159 = vmul.f32 %v1157, %v1158
    %v1160 = vsub.f32 1.0, %v1159
    %v1161 = vmul.f32 %v1158, %v1160
    %v1162 = vadd.f32 %v1158, %v1161
    %vm1163 = vweird.f32 %v1157
    %vm1164 = vweird.f32 %v1158
    %vm1165 = vmor %vm1163, %vm1164
    %v1166 = vsel %vm1165, %v1158, %v1162
    %v1167 = vand.u32 2147483647, %v1157
    %vm1168 = vcmp.eq.f32.partialorder %v1167, 8.507059e+37
    %v1169 = vand.u32 %v1157, 2147483648
    %v1170 = vor.u32 1.1754944e-38, %v1169
    %v1171 = vsel %vm1168, %v1170, %v1166
    %v1172 = vmul.f32 1.0, %v1171
    %vm1173 = vcmask 64512
    %1174 = vst.msk [vmem:[#allocation9] sm:$0xff] %vm1173, %v1172
    // Predicated region
    $region38: #{tpu_custom_call.1} parent=1 // pred_check
      _
    $region39: #{tpu_custom_call.1} parent=1 // pred_check_branch
      %1176 = sbr.rel (0) target = $region41
    $region40: #{tpu_custom_call.1} parent=1 // pred_region
      %1178 = vsyncadd [#allocation6], 0
      %s1180 = sshll.u32 [#allocation9], 4
      %s1181 = int_to_ptr.vmem [resolvable:$true] %s1180
      %s1182 = sshll.u32 %s6, 4
      %s1183 = int_to_ptr.hbm [resolvable:$true] %s1182
      %1185 = dma.vmem_to_hbm [thread:$0]  %s1181, 128, %s1183, [#allocation6]
    $region41: #{tpu_custom_call.1} parent=1 // pred_fallthru
      _
    // Predicated region
    $region42: #{tpu_custom_call.1} parent=1 // pred_check
      _
    $region43: #{tpu_custom_call.1} parent=1 // pred_check_branch
      %1187 = sbr.rel (0) target = $region45
    $region44: #{tpu_custom_call.1} parent=1 // pred_region
      %1189 = dma.done [#allocation6], 128
    $region45: #{tpu_custom_call.1} parent=1 // pred_fallthru
      _
    %1190 = vsyncpa [#allocation5], 1
    %1191 = vsyncpa [#allocation8], 1
    %1192 = vsyncpa [#allocation6], 1

</llo_original>
